<compile_context>
chip_gen: v5e
topology: v5e:2x2
jax: 0.10.0
libtpu: 0.0.40
codegen_flags: <defaults>
</compile_context>

<pallas_src>
import functools
import math

import jax
import jax.numpy as jnp
from jax.experimental import pallas as pl
from jax.experimental.pallas import tpu as pltpu


def _round_up(x, m):
    return ((x + m - 1) // m) * m


# --------------------------------------------------------------------------- #
# Kernel
# --------------------------------------------------------------------------- #
def _lstm_kernel(x_ref, wih_ref, whh_ref, bias_ref, out_ref, h_sc, c_sc, *,
                 hidden, block_t):
    """Fused LSTM recurrence over one (batch block, time block).

    x_ref:     (block_t, bb, D)   bf16, time-major
    wih_ref:   (D, 4H)            bf16, VMEM-resident
    whh_ref:   (H, 4H)            bf16, VMEM-resident
    bias_ref:  (1, 4H)            f32
    out_ref:   (block_t, bb, H)   f32, time-major
    h_sc/c_sc: (bb, H)            f32 scratch, persists across the time grid axis
    Gate order along the 4H axis is [i, f, o, g] (permuted in the wrapper).
    """
    t_blk = pl.program_id(1)

    # h_0 = c_0 = 0 (nn.LSTM default): re-init at the first time block of every
    # batch block.
    @pl.when(t_blk == 0)
    def _():
        h_sc[...] = jnp.zeros_like(h_sc)
        c_sc[...] = jnp.zeros_like(c_sc)

    H = hidden
    bb = x_ref.shape[1]
    wih = wih_ref[...]                                      # (D, 4H) bf16
    whh = whh_ref[...]                                      # (H, 4H) bf16
    # Hoist the bias broadcast out of the time loop (no CSE of broadcast_in_dim).
    bias = jnp.broadcast_to(bias_ref[...], (bb, 4 * H))     # (bb, 4H) f32

    def step(s, h, c):
        # Input projection fused just-in-time: no time dependency, so it hides
        # under the latency-bound recurrent matmul. bf16 MXU, f32 accumulation.
        gates = (jnp.dot(x_ref[s], wih, preferred_element_type=jnp.float32)
                 + jnp.dot(h.astype(jnp.bfloat16), whh,
                           preferred_element_type=jnp.float32)
                 + bias)                                    # (bb, 4H) f32
        # [i, f, o] = one contiguous lane-aligned sigmoid slice; g = tanh slice.
        sig = jax.nn.sigmoid(gates[:, :3 * H])
        i_g = sig[:, 0 * H:1 * H]
        f_g = sig[:, 1 * H:2 * H]
        o_g = sig[:, 2 * H:3 * H]
        g_g = jnp.tanh(gates[:, 3 * H:])
        c_new = f_g * c + i_g * g_g                         # f32 VPU
        h_new = o_g * jnp.tanh(c_new)                       # f32 EUP/VPU
        out_ref[s] = h_new.astype(out_ref.dtype)            # dense (bb, H) store
        return h_new, c_new

    h = h_sc[...]
    c = c_sc[...]
    if block_t <= 16:
        # Short time block: full static unroll (constant indices).
        for s in range(block_t):
            h, c = step(s, h, c)
    else:
        # Long time block: partially-unrolled loop bounds code size / vreg
        # pressure while keeping LLO scheduling visibility.
        h, c = jax.lax.fori_loop(
            0, block_t, lambda s, hc: step(s, *hc), (h, c), unroll=8)

    h_sc[...] = h
    c_sc[...] = c


# --------------------------------------------------------------------------- #
# Wrapper helpers
# --------------------------------------------------------------------------- #
def _prep_gate_rows(w, H, Hp):
    """Reorder stacked gate rows [i,f,g,o] -> [i,f,o,g]; pad each block to Hp rows."""
    K = w.shape[-1]
    w4 = w.reshape(4, H, K)
    w4 = jnp.stack([w4[0], w4[1], w4[3], w4[2]], axis=0)    # i, f, o, g
    w4 = jnp.pad(w4, ((0, 0), (0, Hp - H), (0, 0)))
    return w4.reshape(4 * Hp, K)


def _vmem_capacity_bytes():
    try:
        cap = int(pltpu.get_tpu_info().vmem_capacity_bytes)
        if cap > 0:
            return cap
    except Exception:
        pass
    return 64 * 1024 * 1024        # conservative fallback (v7x physical VMEM)


def _block_vmem_bytes(bb, bt, D, Hp):
    four_h = 4 * Hp
    x_blk = 2 * bb * bt * D * 2            # bf16 x blocks, double-buffered
    out_blk = 2 * bb * bt * Hp * 4         # f32 out blocks, double-buffered
    weights = 2 * (D + Hp) * four_h * 2    # resident bf16 weights (2 buffers each)
    misc = 2 * four_h * 4 + 2 * bb * Hp * 4  # bias + h/c scratch
    return x_blk + out_blk + weights + misc


def _choose_bb(Bp):
    """Batch block: fill up to 256 MXU rows; always a multiple of 8 dividing Bp."""
    if Bp <= 256:
        return Bp
    for cand in (256, 128, 64, 32, 16, 8):
        if Bp % cand == 0:
            return cand
    return 8


def _choose_block_t(T, bb, D, Hp, budget_bytes):
    best = 8
    for bt in range(8, 129, 8):
        if _block_vmem_bytes(bb, bt, D, Hp) <= budget_bytes:
            best = bt
        else:
            break
    return min(best, _round_up(max(T, 1), 8))


# --------------------------------------------------------------------------- #
# Public forward
# --------------------------------------------------------------------------- #
def lstm_forward(x, w_ih, w_hh, b_ih, b_hh):
    """Single-layer batch_first LSTM forward.

    x: (B, T, D); w_ih: (4H, D); w_hh: (4H, H); b_*: (4H,). Returns (B, T, H).
    (The module's forward discards the final (h_n, c_n) states, so they are not
    returned here.)
    """
    B, T, D = x.shape
    H = w_hh.shape[1]
    Hp = _round_up(H, 128)                 # lane-aligned gate slices
    four_hp = 4 * Hp

    # ---- weights / bias: gate order [i,f,o,g], hidden padded H -> Hp.
    # Padded weight rows/cols and bias entries are zero, so padded h/c lanes
    # stay exactly 0 and never contaminate real lanes.
    w_ih_p = _prep_gate_rows(jnp.asarray(w_ih, jnp.float32), H, Hp)      # (4Hp, D)
    w_hh_p = _prep_gate_rows(jnp.asarray(w_hh, jnp.float32), H, Hp)      # (4Hp, H)
    w_hh_p = jnp.pad(w_hh_p, ((0, 0), (0, Hp - H)))                      # (4Hp, Hp)
    bias_p = _prep_gate_rows(
        (jnp.asarray(b_ih, jnp.float32) + jnp.asarray(b_hh, jnp.float32))[:, None],
        H, Hp)[:, 0]                                                     # (4Hp,)

    wih_t = w_ih_p.T.astype(jnp.bfloat16)          # (D, 4Hp)
    whh_t = w_hh_p.T.astype(jnp.bfloat16)          # (Hp, 4Hp)
    bias = bias_p.reshape(1, four_hp)              # (1, 4Hp) f32

    # ---- block sizing (VMEM-budget aware; works for v5e/v6e 128MiB and v7x 64MiB).
    Bp = _round_up(B, 8)
    bb = _choose_bb(Bp)
    vmem_cap = _vmem_capacity_bytes()
    vmem_limit = int(min(max(0.75 * vmem_cap, 32 * 1024 * 1024),
                         128 * 1024 * 1024))
    block_t = _choose_block_t(T, bb, D, Hp, budget_bytes=int(0.6 * vmem_limit))
    T_pad = _round_up(T, block_t)

    # ---- time-major bf16 input, padded to (T_pad, Bp, D).
    x_tm = jnp.transpose(jnp.asarray(x, jnp.float32), (1, 0, 2))
    x_tm = jnp.pad(x_tm, ((0, T_pad - T), (0, Bp - B), (0, 0))).astype(jnp.bfloat16)

    kernel = functools.partial(_lstm_kernel, hidden=Hp, block_t=block_t)

    out_tm = pl.pallas_call(
        kernel,
        out_shape=jax.ShapeDtypeStruct((T_pad, Bp, Hp), jnp.float32),
        grid_spec=pltpu.PrefetchScalarGridSpec(
            num_scalar_prefetch=0,
            grid=(Bp // bb, T_pad // block_t),
            in_specs=[
                # Time-major x blocks (fused input projection reads these).
                pl.BlockSpec((block_t, bb, D), lambda b, t: (t, b, 0)),
                # Resident bf16 weights (constant index_map -> DMA'd once).
                # TODO(synk): single-buffer these (pipeline_mode=pl.Buffered(1))
                # once validated; default double-buffering doubles weight VMEM
                # footprint at large H.
                pl.BlockSpec((D, four_hp), lambda b, t: (0, 0)),
                pl.BlockSpec((Hp, four_hp), lambda b, t: (0, 0)),
                pl.BlockSpec((1, four_hp), lambda b, t: (0, 0)),
            ],
            out_specs=pl.BlockSpec((block_t, bb, Hp), lambda b, t: (t, b, 0)),
            scratch_shapes=[
                pltpu.VMEM((bb, Hp), jnp.float32),   # h state (persists over time)
                pltpu.VMEM((bb, Hp), jnp.float32),   # c state
            ],
        ),
        compiler_params=pltpu.CompilerParams(
            # Batch blocks are independent; the time axis is the sequential
            # recurrence.
            # TODO(synk): on v7x, force >=2 batch blocks and use
            # pltpu.CORE_PARALLEL on the batch axis so both TensorCores work.
            dimension_semantics=("parallel", "arbitrary"),
            vmem_limit_bytes=vmem_limit,
        ),
    )(x_tm, wih_t, whh_t, bias)

    # Strip padding and return batch_first output.
    return jnp.transpose(out_tm[:T, :B, :H], (1, 0, 2))


# --------------------------------------------------------------------------- #
# Reference & test
# --------------------------------------------------------------------------- #
def _xavier_uniform(key, shape):
    # PyTorch xavier_uniform_ on a (fan_out, fan_in) matrix.
    fan_out, fan_in = shape
    a = math.sqrt(6.0 / (fan_in + fan_out))
    return jax.random.uniform(key, shape, jnp.float32, minval=-a, maxval=a)


def _reference_lstm(x, w_ih, w_hh, b_ih, b_hh):
    """Plain-JAX f32 reference matching torch.nn.LSTM semantics."""
    B, T, D = x.shape
    H = w_hh.shape[1]

    def step(carry, x_t):
        h, c = carry
        gates = x_t @ w_ih.T + b_ih + h @ w_hh.T + b_hh
        i = jax.nn.sigmoid(gates[:, 0 * H:1 * H])
        f = jax.nn.sigmoid(gates[:, 1 * H:2 * H])
        g = jnp.tanh(gates[:, 2 * H:3 * H])
        o = jax.nn.sigmoid(gates[:, 3 * H:4 * H])
        c = f * c + i * g
        h = o * jnp.tanh(c)
        return (h, c), h

    h0 = jnp.zeros((B, H), jnp.float32)
    c0 = jnp.zeros((B, H), jnp.float32)
    _, hs = jax.lax.scan(step, (h0, c0), jnp.transpose(x, (1, 0, 2)))
    return jnp.transpose(hs, (1, 0, 2))


if __name__ == "__main__":
    # Small shapes consistent with the module: batch=2, seq=8, input=16, hidden=32.
    B, T, D, H = 2, 8, 16, 32

    key = jax.random.PRNGKey(0)
    k_x, k_wih, k_whh = jax.random.split(key, 3)

    x = jax.random.normal(k_x, (B, T, D), jnp.float32)

    # Deterministic init per LSTM.init_weights: xavier_uniform weights, zero biases.
    w_ih = _xavier_uniform(k_wih, (4 * H, D))
    w_hh = _xavier_uniform(k_whh, (4 * H, H))
    b_ih = jnp.zeros((4 * H,), jnp.float32)
    b_hh = jnp.zeros((4 * H,), jnp.float32)

    out = jax.block_until_ready(lstm_forward(x, w_ih, w_hh, b_ih, b_hh))
    ref = _reference_lstm(x, w_ih, w_hh, b_ih, b_hh)

    assert out.shape == (B, T, H)
    # bf16 MXU operands with f32 accumulation -> looser tolerance than pure f32.
    # NOTE: h is cast to bf16 per step for the recurrent matmul; drift over very
    # long sequences should be validated if tighter parity is needed.
    assert jnp.allclose(out, ref, atol=2e-2, rtol=2e-2), "mismatch vs reference"

    print("KERNEL_OK")
</pallas_src>

<mosaic_0001>
module attributes {stable_mosaic.version = 11 : i64} {
  func.func @_lstm_kernel(%arg0: i32, %arg1: i32, %arg2: memref<8x8x16xbf16, #tpu.memory_space<vmem>>, %arg3: memref<16x512xbf16, #tpu.memory_space<vmem>>, %arg4: memref<128x512xbf16, #tpu.memory_space<vmem>>, %arg5: memref<1x512xf32, #tpu.memory_space<vmem>>, %arg6: memref<8x8x128xf32, #tpu.memory_space<vmem>>, %arg7: memref<8x128xf32, #tpu.memory_space<vmem>>, %arg8: memref<8x128xf32, #tpu.memory_space<vmem>>) attributes {dimension_semantics = [#tpu.dimension_semantics<parallel>, #tpu.dimension_semantics<arbitrary>], iteration_bounds = array<i64: 1, 1>, scalar_prefetch = 0 : i64, scratch_operands = 2 : i64, tpu.core_type = #tpu.core_type<tc>, window_params = [{transform_indices = @transform_0, window_bounds = array<i64: 8, 8, 16>}, {pipeline_mode = #tpu.pipeline_mode<synchronous>, transform_indices = @transform_1, window_bounds = array<i64: 16, 512>}, {pipeline_mode = #tpu.pipeline_mode<synchronous>, transform_indices = @transform_2, window_bounds = array<i64: 128, 512>}, {pipeline_mode = #tpu.pipeline_mode<synchronous>, transform_indices = @transform_3, window_bounds = array<i64: 1, 512>}, {transform_indices = @transform_4, window_bounds = array<i64: 8, 8, 128>}]} {
    %c0_i32 = arith.constant 0 : i32
    %0 = arith.cmpi eq, %arg1, %c0_i32 : i32
    %1 = arith.extui %0 : i1 to i32
    %c0_i32_0 = arith.constant 0 : i32
    %2 = arith.cmpi ne, %1, %c0_i32_0 : i32
    scf.if %2 {
      %cst_78 = arith.constant 0.000000e+00 : f32
      %220 = vector.broadcast %cst_78 : f32 to vector<8x128xf32>
      %c0_79 = arith.constant 0 : index
      %c0_80 = arith.constant 0 : index
      %221 = vector.load %arg7[%c0_79, %c0_80] : memref<8x128xf32, #tpu.memory_space<vmem>>, vector<8x128xf32>
      tpu.vector_store %arg7[%c0_79, %c0_80], %220 {strides = array<i32>} : memref<8x128xf32, #tpu.memory_space<vmem>>, vector<8x128xf32>,
      %cst_81 = arith.constant 0.000000e+00 : f32
      %222 = vector.broadcast %cst_81 : f32 to vector<8x128xf32>
      %c0_82 = arith.constant 0 : index
      %c0_83 = arith.constant 0 : index
      %223 = vector.load %arg8[%c0_82, %c0_83] : memref<8x128xf32, #tpu.memory_space<vmem>>, vector<8x128xf32>
      tpu.vector_store %arg8[%c0_82, %c0_83], %222 {strides = array<i32>} : memref<8x128xf32, #tpu.memory_space<vmem>>, vector<8x128xf32>,
    } else {
    }
    %c0 = arith.constant 0 : index
    %c0_1 = arith.constant 0 : index
    %3 = vector.load %arg3[%c0, %c0_1] : memref<16x512xbf16, #tpu.memory_space<vmem>>, vector<16x512xbf16>
    %c0_2 = arith.constant 0 : index
    %c0_3 = arith.constant 0 : index
    %4 = vector.load %arg4[%c0_2, %c0_3] : memref<128x512xbf16, #tpu.memory_space<vmem>>, vector<128x512xbf16>
    %c0_4 = arith.constant 0 : index
    %c0_5 = arith.constant 0 : index
    %5 = vector.load %arg5[%c0_4, %c0_5] : memref<1x512xf32, #tpu.memory_space<vmem>>, vector<1x512xf32>
    %6 = vector.shape_cast %5 : vector<1x512xf32> to vector<1x512xf32>
    %7 = vector.broadcast %6 : vector<1x512xf32> to vector<8x512xf32>
    %c0_6 = arith.constant 0 : index
    %c0_7 = arith.constant 0 : index
    %8 = vector.load %arg7[%c0_6, %c0_7] : memref<8x128xf32, #tpu.memory_space<vmem>>, vector<8x128xf32>
    %c0_8 = arith.constant 0 : index
    %c0_9 = arith.constant 0 : index
    %9 = vector.load %arg8[%c0_8, %c0_9] : memref<8x128xf32, #tpu.memory_space<vmem>>, vector<8x128xf32>
    %c0_10 = arith.constant 0 : index
    %c0_11 = arith.constant 0 : index
    %c0_12 = arith.constant 0 : index
    %10 = vector.load %arg2[%c0_10, %c0_11, %c0_12] : memref<8x8x16xbf16, #tpu.memory_space<vmem>>, vector<1x8x16xbf16>
    %11 = vector.shape_cast %10 : vector<1x8x16xbf16> to vector<8x16xbf16>
    %cst = arith.constant dense<0.000000e+00> : vector<8x512xf32>
    %12 = tpu.matmul %11, %3, %cst {dimension_numbers = #tpu.dot_dimension_numbers<[1], [0], [0], [1], [0, 0, 1, 1], [], []>} : vector<8x16xbf16>, vector<16x512xbf16>, vector<8x512xf32> -> vector<8x512xf32>
    %13 = arith.truncf %8 : vector<8x128xf32> to vector<8x128xbf16>
    %cst_13 = arith.constant dense<0.000000e+00> : vector<8x512xf32>
    %14 = tpu.matmul %13, %4, %cst_13 {dimension_numbers = #tpu.dot_dimension_numbers<[1], [0], [0], [1], [0, 0, 1, 1], [], []>} : vector<8x128xbf16>, vector<128x512xbf16>, vector<8x512xf32> -> vector<8x512xf32>
    %15 = arith.addf %12, %14 : vector<8x512xf32>
    %16 = arith.addf %15, %7 : vector<8x512xf32>
    %17 = vector.extract_strided_slice %16 {offsets = [0, 0], sizes = [8, 384], strides = [1, 1]} : vector<8x512xf32> to vector<8x384xf32>
    %18 = arith.negf %17 : vector<8x384xf32>
    %19 = math.exp %18 : vector<8x384xf32>
    %cst_14 = arith.constant 1.000000e+00 : f32
    %20 = vector.broadcast %cst_14 : f32 to vector<8x384xf32>
    %21 = arith.addf %20, %19 : vector<8x384xf32>
    %22 = arith.divf %20, %21 : vector<8x384xf32>
    %23 = vector.extract_strided_slice %22 {offsets = [0, 0], sizes = [8, 128], strides = [1, 1]} : vector<8x384xf32> to vector<8x128xf32>
    %24 = vector.extract_strided_slice %22 {offsets = [0, 128], sizes = [8, 128], strides = [1, 1]} : vector<8x384xf32> to vector<8x128xf32>
    %25 = vector.extract_strided_slice %22 {offsets = [0, 256], sizes = [8, 128], strides = [1, 1]} : vector<8x384xf32> to vector<8x128xf32>
    %26 = vector.extract_strided_slice %16 {offsets = [0, 384], sizes = [8, 128], strides = [1, 1]} : vector<8x512xf32> to vector<8x128xf32>
    %27 = math.tanh %26 : vector<8x128xf32>
    %28 = arith.mulf %24, %9 : vector<8x128xf32>
    %29 = arith.mulf %23, %27 : vector<8x128xf32>
    %30 = arith.addf %28, %29 : vector<8x128xf32>
    %31 = math.tanh %30 : vector<8x128xf32>
    %32 = arith.mulf %25, %31 : vector<8x128xf32>
    %c0_15 = arith.constant 0 : index
    %c0_16 = arith.constant 0 : index
    %c0_17 = arith.constant 0 : index
    %33 = vector.load %arg6[%c0_15, %c0_16, %c0_17] : memref<8x8x128xf32, #tpu.memory_space<vmem>>, vector<1x8x128xf32>
    %34 = vector.shape_cast %33 : vector<1x8x128xf32> to vector<8x128xf32>
    %35 = vector.shape_cast %32 : vector<8x128xf32> to vector<1x8x128xf32>
    tpu.vector_store %arg6[%c0_15, %c0_16, %c0_17], %35 {strides = array<i32>} : memref<8x8x128xf32, #tpu.memory_space<vmem>>, vector<1x8x128xf32>,
    %c1 = arith.constant 1 : index
    %c0_18 = arith.constant 0 : index
    %c0_19 = arith.constant 0 : index
    %36 = vector.load %arg2[%c1, %c0_18, %c0_19] : memref<8x8x16xbf16, #tpu.memory_space<vmem>>, vector<1x8x16xbf16>
    %37 = vector.shape_cast %36 : vector<1x8x16xbf16> to vector<8x16xbf16>
    %cst_20 = arith.constant dense<0.000000e+00> : vector<8x512xf32>
    %38 = tpu.matmul %37, %3, %cst_20 {dimension_numbers = #tpu.dot_dimension_numbers<[1], [0], [0], [1], [0, 0, 1, 1], [], []>} : vector<8x16xbf16>, vector<16x512xbf16>, vector<8x512xf32> -> vector<8x512xf32>
    %39 = arith.truncf %32 : vector<8x128xf32> to vector<8x128xbf16>
    %cst_21 = arith.constant dense<0.000000e+00> : vector<8x512xf32>
    %40 = tpu.matmul %39, %4, %cst_21 {dimension_numbers = #tpu.dot_dimension_numbers<[1], [0], [0], [1], [0, 0, 1, 1], [], []>} : vector<8x128xbf16>, vector<128x512xbf16>, vector<8x512xf32> -> vector<8x512xf32>
    %41 = arith.addf %38, %40 : vector<8x512xf32>
    %42 = arith.addf %41, %7 : vector<8x512xf32>
    %43 = vector.extract_strided_slice %42 {offsets = [0, 0], sizes = [8, 384], strides = [1, 1]} : vector<8x512xf32> to vector<8x384xf32>
    %44 = arith.negf %43 : vector<8x384xf32>
    %45 = math.exp %44 : vector<8x384xf32>
    %cst_22 = arith.constant 1.000000e+00 : f32
    %46 = vector.broadcast %cst_22 : f32 to vector<8x384xf32>
    %47 = arith.addf %46, %45 : vector<8x384xf32>
    %48 = arith.divf %46, %47 : vector<8x384xf32>
    %49 = vector.extract_strided_slice %48 {offsets = [0, 0], sizes = [8, 128], strides = [1, 1]} : vector<8x384xf32> to vector<8x128xf32>
    %50 = vector.extract_strided_slice %48 {offsets = [0, 128], sizes = [8, 128], strides = [1, 1]} : vector<8x384xf32> to vector<8x128xf32>
    %51 = vector.extract_strided_slice %48 {offsets = [0, 256], sizes = [8, 128], strides = [1, 1]} : vector<8x384xf32> to vector<8x128xf32>
    %52 = vector.extract_strided_slice %42 {offsets = [0, 384], sizes = [8, 128], strides = [1, 1]} : vector<8x512xf32> to vector<8x128xf32>
    %53 = math.tanh %52 : vector<8x128xf32>
    %54 = arith.mulf %50, %30 : vector<8x128xf32>
    %55 = arith.mulf %49, %53 : vector<8x128xf32>
    %56 = arith.addf %54, %55 : vector<8x128xf32>
    %57 = math.tanh %56 : vector<8x128xf32>
    %58 = arith.mulf %51, %57 : vector<8x128xf32>
    %c1_23 = arith.constant 1 : index
    %c0_24 = arith.constant 0 : index
    %c0_25 = arith.constant 0 : index
    %59 = vector.load %arg6[%c1_23, %c0_24, %c0_25] : memref<8x8x128xf32, #tpu.memory_space<vmem>>, vector<1x8x128xf32>
    %60 = vector.shape_cast %59 : vector<1x8x128xf32> to vector<8x128xf32>
    %61 = vector.shape_cast %58 : vector<8x128xf32> to vector<1x8x128xf32>
    tpu.vector_store %arg6[%c1_23, %c0_24, %c0_25], %61 {strides = array<i32>} : memref<8x8x128xf32, #tpu.memory_space<vmem>>, vector<1x8x128xf32>,
    %c2 = arith.constant 2 : index
    %c0_26 = arith.constant 0 : index
    %c0_27 = arith.constant 0 : index
    %62 = vector.load %arg2[%c2, %c0_26, %c0_27] : memref<8x8x16xbf16, #tpu.memory_space<vmem>>, vector<1x8x16xbf16>
    %63 = vector.shape_cast %62 : vector<1x8x16xbf16> to vector<8x16xbf16>
    %cst_28 = arith.constant dense<0.000000e+00> : vector<8x512xf32>
    %64 = tpu.matmul %63, %3, %cst_28 {dimension_numbers = #tpu.dot_dimension_numbers<[1], [0], [0], [1], [0, 0, 1, 1], [], []>} : vector<8x16xbf16>, vector<16x512xbf16>, vector<8x512xf32> -> vector<8x512xf32>
    %65 = arith.truncf %58 : vector<8x128xf32> to vector<8x128xbf16>
    %cst_29 = arith.constant dense<0.000000e+00> : vector<8x512xf32>
    %66 = tpu.matmul %65, %4, %cst_29 {dimension_numbers = #tpu.dot_dimension_numbers<[1], [0], [0], [1], [0, 0, 1, 1], [], []>} : vector<8x128xbf16>, vector<128x512xbf16>, vector<8x512xf32> -> vector<8x512xf32>
    %67 = arith.addf %64, %66 : vector<8x512xf32>
    %68 = arith.addf %67, %7 : vector<8x512xf32>
    %69 = vector.extract_strided_slice %68 {offsets = [0, 0], sizes = [8, 384], strides = [1, 1]} : vector<8x512xf32> to vector<8x384xf32>
    %70 = arith.negf %69 : vector<8x384xf32>
    %71 = math.exp %70 : vector<8x384xf32>
    %cst_30 = arith.constant 1.000000e+00 : f32
    %72 = vector.broadcast %cst_30 : f32 to vector<8x384xf32>
    %73 = arith.addf %72, %71 : vector<8x384xf32>
    %74 = arith.divf %72, %73 : vector<8x384xf32>
    %75 = vector.extract_strided_slice %74 {offsets = [0, 0], sizes = [8, 128], strides = [1, 1]} : vector<8x384xf32> to vector<8x128xf32>
    %76 = vector.extract_strided_slice %74 {offsets = [0, 128], sizes = [8, 128], strides = [1, 1]} : vector<8x384xf32> to vector<8x128xf32>
    %77 = vector.extract_strided_slice %74 {offsets = [0, 256], sizes = [8, 128], strides = [1, 1]} : vector<8x384xf32> to vector<8x128xf32>
    %78 = vector.extract_strided_slice %68 {offsets = [0, 384], sizes = [8, 128], strides = [1, 1]} : vector<8x512xf32> to vector<8x128xf32>
    %79 = math.tanh %78 : vector<8x128xf32>
    %80 = arith.mulf %76, %56 : vector<8x128xf32>
    %81 = arith.mulf %75, %79 : vector<8x128xf32>
    %82 = arith.addf %80, %81 : vector<8x128xf32>
    %83 = math.tanh %82 : vector<8x128xf32>
    %84 = arith.mulf %77, %83 : vector<8x128xf32>
    %c2_31 = arith.constant 2 : index
    %c0_32 = arith.constant 0 : index
    %c0_33 = arith.constant 0 : index
    %85 = vector.load %arg6[%c2_31, %c0_32, %c0_33] : memref<8x8x128xf32, #tpu.memory_space<vmem>>, vector<1x8x128xf32>
    %86 = vector.shape_cast %85 : vector<1x8x128xf32> to vector<8x128xf32>
    %87 = vector.shape_cast %84 : vector<8x128xf32> to vector<1x8x128xf32>
    tpu.vector_store %arg6[%c2_31, %c0_32, %c0_33], %87 {strides = array<i32>} : memref<8x8x128xf32, #tpu.memory_space<vmem>>, vector<1x8x128xf32>,
    %c3 = arith.constant 3 : index
    %c0_34 = arith.constant 0 : index
    %c0_35 = arith.constant 0 : index
    %88 = vector.load %arg2[%c3, %c0_34, %c0_35] : memref<8x8x16xbf16, #tpu.memory_space<vmem>>, vector<1x8x16xbf16>
    %89 = vector.shape_cast %88 : vector<1x8x16xbf16> to vector<8x16xbf16>
    %cst_36 = arith.constant dense<0.000000e+00> : vector<8x512xf32>
    %90 = tpu.matmul %89, %3, %cst_36 {dimension_numbers = #tpu.dot_dimension_numbers<[1], [0], [0], [1], [0, 0, 1, 1], [], []>} : vector<8x16xbf16>, vector<16x512xbf16>, vector<8x512xf32> -> vector<8x512xf32>
    %91 = arith.truncf %84 : vector<8x128xf32> to vector<8x128xbf16>
    %cst_37 = arith.constant dense<0.000000e+00> : vector<8x512xf32>
    %92 = tpu.matmul %91, %4, %cst_37 {dimension_numbers = #tpu.dot_dimension_numbers<[1], [0], [0], [1], [0, 0, 1, 1], [], []>} : vector<8x128xbf16>, vector<128x512xbf16>, vector<8x512xf32> -> vector<8x512xf32>
    %93 = arith.addf %90, %92 : vector<8x512xf32>
    %94 = arith.addf %93, %7 : vector<8x512xf32>
    %95 = vector.extract_strided_slice %94 {offsets = [0, 0], sizes = [8, 384], strides = [1, 1]} : vector<8x512xf32> to vector<8x384xf32>
    %96 = arith.negf %95 : vector<8x384xf32>
    %97 = math.exp %96 : vector<8x384xf32>
    %cst_38 = arith.constant 1.000000e+00 : f32
    %98 = vector.broadcast %cst_38 : f32 to vector<8x384xf32>
    %99 = arith.addf %98, %97 : vector<8x384xf32>
    %100 = arith.divf %98, %99 : vector<8x384xf32>
    %101 = vector.extract_strided_slice %100 {offsets = [0, 0], sizes = [8, 128], strides = [1, 1]} : vector<8x384xf32> to vector<8x128xf32>
    %102 = vector.extract_strided_slice %100 {offsets = [0, 128], sizes = [8, 128], strides = [1, 1]} : vector<8x384xf32> to vector<8x128xf32>
    %103 = vector.extract_strided_slice %100 {offsets = [0, 256], sizes = [8, 128], strides = [1, 1]} : vector<8x384xf32> to vector<8x128xf32>
    %104 = vector.extract_strided_slice %94 {offsets = [0, 384], sizes = [8, 128], strides = [1, 1]} : vector<8x512xf32> to vector<8x128xf32>
    %105 = math.tanh %104 : vector<8x128xf32>
    %106 = arith.mulf %102, %82 : vector<8x128xf32>
    %107 = arith.mulf %101, %105 : vector<8x128xf32>
    %108 = arith.addf %106, %107 : vector<8x128xf32>
    %109 = math.tanh %108 : vector<8x128xf32>
    %110 = arith.mulf %103, %109 : vector<8x128xf32>
    %c3_39 = arith.constant 3 : index
    %c0_40 = arith.constant 0 : index
    %c0_41 = arith.constant 0 : index
    %111 = vector.load %arg6[%c3_39, %c0_40, %c0_41] : memref<8x8x128xf32, #tpu.memory_space<vmem>>, vector<1x8x128xf32>
    %112 = vector.shape_cast %111 : vector<1x8x128xf32> to vector<8x128xf32>
    %113 = vector.shape_cast %110 : vector<8x128xf32> to vector<1x8x128xf32>
    tpu.vector_store %arg6[%c3_39, %c0_40, %c0_41], %113 {strides = array<i32>} : memref<8x8x128xf32, #tpu.memory_space<vmem>>, vector<1x8x128xf32>,
    %c4 = arith.constant 4 : index
    %c0_42 = arith.constant 0 : index
    %c0_43 = arith.constant 0 : index
    %114 = vector.load %arg2[%c4, %c0_42, %c0_43] : memref<8x8x16xbf16, #tpu.memory_space<vmem>>, vector<1x8x16xbf16>
    %115 = vector.shape_cast %114 : vector<1x8x16xbf16> to vector<8x16xbf16>
    %cst_44 = arith.constant dense<0.000000e+00> : vector<8x512xf32>
    %116 = tpu.matmul %115, %3, %cst_44 {dimension_numbers = #tpu.dot_dimension_numbers<[1], [0], [0], [1], [0, 0, 1, 1], [], []>} : vector<8x16xbf16>, vector<16x512xbf16>, vector<8x512xf32> -> vector<8x512xf32>
    %117 = arith.truncf %110 : vector<8x128xf32> to vector<8x128xbf16>
    %cst_45 = arith.constant dense<0.000000e+00> : vector<8x512xf32>
    %118 = tpu.matmul %117, %4, %cst_45 {dimension_numbers = #tpu.dot_dimension_numbers<[1], [0], [0], [1], [0, 0, 1, 1], [], []>} : vector<8x128xbf16>, vector<128x512xbf16>, vector<8x512xf32> -> vector<8x512xf32>
    %119 = arith.addf %116, %118 : vector<8x512xf32>
    %120 = arith.addf %119, %7 : vector<8x512xf32>
    %121 = vector.extract_strided_slice %120 {offsets = [0, 0], sizes = [8, 384], strides = [1, 1]} : vector<8x512xf32> to vector<8x384xf32>
    %122 = arith.negf %121 : vector<8x384xf32>
    %123 = math.exp %122 : vector<8x384xf32>
    %cst_46 = arith.constant 1.000000e+00 : f32
    %124 = vector.broadcast %cst_46 : f32 to vector<8x384xf32>
    %125 = arith.addf %124, %123 : vector<8x384xf32>
    %126 = arith.divf %124, %125 : vector<8x384xf32>
    %127 = vector.extract_strided_slice %126 {offsets = [0, 0], sizes = [8, 128], strides = [1, 1]} : vector<8x384xf32> to vector<8x128xf32>
    %128 = vector.extract_strided_slice %126 {offsets = [0, 128], sizes = [8, 128], strides = [1, 1]} : vector<8x384xf32> to vector<8x128xf32>
    %129 = vector.extract_strided_slice %126 {offsets = [0, 256], sizes = [8, 128], strides = [1, 1]} : vector<8x384xf32> to vector<8x128xf32>
    %130 = vector.extract_strided_slice %120 {offsets = [0, 384], sizes = [8, 128], strides = [1, 1]} : vector<8x512xf32> to vector<8x128xf32>
    %131 = math.tanh %130 : vector<8x128xf32>
    %132 = arith.mulf %128, %108 : vector<8x128xf32>
    %133 = arith.mulf %127, %131 : vector<8x128xf32>
    %134 = arith.addf %132, %133 : vector<8x128xf32>
    %135 = math.tanh %134 : vector<8x128xf32>
    %136 = arith.mulf %129, %135 : vector<8x128xf32>
    %c4_47 = arith.constant 4 : index
    %c0_48 = arith.constant 0 : index
    %c0_49 = arith.constant 0 : index
    %137 = vector.load %arg6[%c4_47, %c0_48, %c0_49] : memref<8x8x128xf32, #tpu.memory_space<vmem>>, vector<1x8x128xf32>
    %138 = vector.shape_cast %137 : vector<1x8x128xf32> to vector<8x128xf32>
    %139 = vector.shape_cast %136 : vector<8x128xf32> to vector<1x8x128xf32>
    tpu.vector_store %arg6[%c4_47, %c0_48, %c0_49], %139 {strides = array<i32>} : memref<8x8x128xf32, #tpu.memory_space<vmem>>, vector<1x8x128xf32>,
    %c5 = arith.constant 5 : index
    %c0_50 = arith.constant 0 : index
    %c0_51 = arith.constant 0 : index
    %140 = vector.load %arg2[%c5, %c0_50, %c0_51] : memref<8x8x16xbf16, #tpu.memory_space<vmem>>, vector<1x8x16xbf16>
    %141 = vector.shape_cast %140 : vector<1x8x16xbf16> to vector<8x16xbf16>
    %cst_52 = arith.constant dense<0.000000e+00> : vector<8x512xf32>
    %142 = tpu.matmul %141, %3, %cst_52 {dimension_numbers = #tpu.dot_dimension_numbers<[1], [0], [0], [1], [0, 0, 1, 1], [], []>} : vector<8x16xbf16>, vector<16x512xbf16>, vector<8x512xf32> -> vector<8x512xf32>
    %143 = arith.truncf %136 : vector<8x128xf32> to vector<8x128xbf16>
    %cst_53 = arith.constant dense<0.000000e+00> : vector<8x512xf32>
    %144 = tpu.matmul %143, %4, %cst_53 {dimension_numbers = #tpu.dot_dimension_numbers<[1], [0], [0], [1], [0, 0, 1, 1], [], []>} : vector<8x128xbf16>, vector<128x512xbf16>, vector<8x512xf32> -> vector<8x512xf32>
    %145 = arith.addf %142, %144 : vector<8x512xf32>
    %146 = arith.addf %145, %7 : vector<8x512xf32>
    %147 = vector.extract_strided_slice %146 {offsets = [0, 0], sizes = [8, 384], strides = [1, 1]} : vector<8x512xf32> to vector<8x384xf32>
    %148 = arith.negf %147 : vector<8x384xf32>
    %149 = math.exp %148 : vector<8x384xf32>
    %cst_54 = arith.constant 1.000000e+00 : f32
    %150 = vector.broadcast %cst_54 : f32 to vector<8x384xf32>
    %151 = arith.addf %150, %149 : vector<8x384xf32>
    %152 = arith.divf %150, %151 : vector<8x384xf32>
    %153 = vector.extract_strided_slice %152 {offsets = [0, 0], sizes = [8, 128], strides = [1, 1]} : vector<8x384xf32> to vector<8x128xf32>
    %154 = vector.extract_strided_slice %152 {offsets = [0, 128], sizes = [8, 128], strides = [1, 1]} : vector<8x384xf32> to vector<8x128xf32>
    %155 = vector.extract_strided_slice %152 {offsets = [0, 256], sizes = [8, 128], strides = [1, 1]} : vector<8x384xf32> to vector<8x128xf32>
    %156 = vector.extract_strided_slice %146 {offsets = [0, 384], sizes = [8, 128], strides = [1, 1]} : vector<8x512xf32> to vector<8x128xf32>
    %157 = math.tanh %156 : vector<8x128xf32>
    %158 = arith.mulf %154, %134 : vector<8x128xf32>
    %159 = arith.mulf %153, %157 : vector<8x128xf32>
    %160 = arith.addf %158, %159 : vector<8x128xf32>
    %161 = math.tanh %160 : vector<8x128xf32>
    %162 = arith.mulf %155, %161 : vector<8x128xf32>
    %c5_55 = arith.constant 5 : index
    %c0_56 = arith.constant 0 : index
    %c0_57 = arith.constant 0 : index
    %163 = vector.load %arg6[%c5_55, %c0_56, %c0_57] : memref<8x8x128xf32, #tpu.memory_space<vmem>>, vector<1x8x128xf32>
    %164 = vector.shape_cast %163 : vector<1x8x128xf32> to vector<8x128xf32>
    %165 = vector.shape_cast %162 : vector<8x128xf32> to vector<1x8x128xf32>
    tpu.vector_store %arg6[%c5_55, %c0_56, %c0_57], %165 {strides = array<i32>} : memref<8x8x128xf32, #tpu.memory_space<vmem>>, vector<1x8x128xf32>,
    %c6 = arith.constant 6 : index
    %c0_58 = arith.constant 0 : index
    %c0_59 = arith.constant 0 : index
    %166 = vector.load %arg2[%c6, %c0_58, %c0_59] : memref<8x8x16xbf16, #tpu.memory_space<vmem>>, vector<1x8x16xbf16>
    %167 = vector.shape_cast %166 : vector<1x8x16xbf16> to vector<8x16xbf16>
    %cst_60 = arith.constant dense<0.000000e+00> : vector<8x512xf32>
    %168 = tpu.matmul %167, %3, %cst_60 {dimension_numbers = #tpu.dot_dimension_numbers<[1], [0], [0], [1], [0, 0, 1, 1], [], []>} : vector<8x16xbf16>, vector<16x512xbf16>, vector<8x512xf32> -> vector<8x512xf32>
    %169 = arith.truncf %162 : vector<8x128xf32> to vector<8x128xbf16>
    %cst_61 = arith.constant dense<0.000000e+00> : vector<8x512xf32>
    %170 = tpu.matmul %169, %4, %cst_61 {dimension_numbers = #tpu.dot_dimension_numbers<[1], [0], [0], [1], [0, 0, 1, 1], [], []>} : vector<8x128xbf16>, vector<128x512xbf16>, vector<8x512xf32> -> vector<8x512xf32>
    %171 = arith.addf %168, %170 : vector<8x512xf32>
    %172 = arith.addf %171, %7 : vector<8x512xf32>
    %173 = vector.extract_strided_slice %172 {offsets = [0, 0], sizes = [8, 384], strides = [1, 1]} : vector<8x512xf32> to vector<8x384xf32>
    %174 = arith.negf %173 : vector<8x384xf32>
    %175 = math.exp %174 : vector<8x384xf32>
    %cst_62 = arith.constant 1.000000e+00 : f32
    %176 = vector.broadcast %cst_62 : f32 to vector<8x384xf32>
    %177 = arith.addf %176, %175 : vector<8x384xf32>
    %178 = arith.divf %176, %177 : vector<8x384xf32>
    %179 = vector.extract_strided_slice %178 {offsets = [0, 0], sizes = [8, 128], strides = [1, 1]} : vector<8x384xf32> to vector<8x128xf32>
    %180 = vector.extract_strided_slice %178 {offsets = [0, 128], sizes = [8, 128], strides = [1, 1]} : vector<8x384xf32> to vector<8x128xf32>
    %181 = vector.extract_strided_slice %178 {offsets = [0, 256], sizes = [8, 128], strides = [1, 1]} : vector<8x384xf32> to vector<8x128xf32>
    %182 = vector.extract_strided_slice %172 {offsets = [0, 384], sizes = [8, 128], strides = [1, 1]} : vector<8x512xf32> to vector<8x128xf32>
    %183 = math.tanh %182 : vector<8x128xf32>
    %184 = arith.mulf %180, %160 : vector<8x128xf32>
    %185 = arith.mulf %179, %183 : vector<8x128xf32>
    %186 = arith.addf %184, %185 : vector<8x128xf32>
    %187 = math.tanh %186 : vector<8x128xf32>
    %188 = arith.mulf %181, %187 : vector<8x128xf32>
    %c6_63 = arith.constant 6 : index
    %c0_64 = arith.constant 0 : index
    %c0_65 = arith.constant 0 : index
    %189 = vector.load %arg6[%c6_63, %c0_64, %c0_65] : memref<8x8x128xf32, #tpu.memory_space<vmem>>, vector<1x8x128xf32>
    %190 = vector.shape_cast %189 : vector<1x8x128xf32> to vector<8x128xf32>
    %191 = vector.shape_cast %188 : vector<8x128xf32> to vector<1x8x128xf32>
    tpu.vector_store %arg6[%c6_63, %c0_64, %c0_65], %191 {strides = array<i32>} : memref<8x8x128xf32, #tpu.memory_space<vmem>>, vector<1x8x128xf32>,
    %c7 = arith.constant 7 : index
    %c0_66 = arith.constant 0 : index
    %c0_67 = arith.constant 0 : index
    %192 = vector.load %arg2[%c7, %c0_66, %c0_67] : memref<8x8x16xbf16, #tpu.memory_space<vmem>>, vector<1x8x16xbf16>
    %193 = vector.shape_cast %192 : vector<1x8x16xbf16> to vector<8x16xbf16>
    %cst_68 = arith.constant dense<0.000000e+00> : vector<8x512xf32>
    %194 = tpu.matmul %193, %3, %cst_68 {dimension_numbers = #tpu.dot_dimension_numbers<[1], [0], [0], [1], [0, 0, 1, 1], [], []>} : vector<8x16xbf16>, vector<16x512xbf16>, vector<8x512xf32> -> vector<8x512xf32>
    %195 = arith.truncf %188 : vector<8x128xf32> to vector<8x128xbf16>
    %cst_69 = arith.constant dense<0.000000e+00> : vector<8x512xf32>
    %196 = tpu.matmul %195, %4, %cst_69 {dimension_numbers = #tpu.dot_dimension_numbers<[1], [0], [0], [1], [0, 0, 1, 1], [], []>} : vector<8x128xbf16>, vector<128x512xbf16>, vector<8x512xf32> -> vector<8x512xf32>
    %197 = arith.addf %194, %196 : vector<8x512xf32>
    %198 = arith.addf %197, %7 : vector<8x512xf32>
    %199 = vector.extract_strided_slice %198 {offsets = [0, 0], sizes = [8, 384], strides = [1, 1]} : vector<8x512xf32> to vector<8x384xf32>
    %200 = arith.negf %199 : vector<8x384xf32>
    %201 = math.exp %200 : vector<8x384xf32>
    %cst_70 = arith.constant 1.000000e+00 : f32
    %202 = vector.broadcast %cst_70 : f32 to vector<8x384xf32>
    %203 = arith.addf %202, %201 : vector<8x384xf32>
    %204 = arith.divf %202, %203 : vector<8x384xf32>
    %205 = vector.extract_strided_slice %204 {offsets = [0, 0], sizes = [8, 128], strides = [1, 1]} : vector<8x384xf32> to vector<8x128xf32>
    %206 = vector.extract_strided_slice %204 {offsets = [0, 128], sizes = [8, 128], strides = [1, 1]} : vector<8x384xf32> to vector<8x128xf32>
    %207 = vector.extract_strided_slice %204 {offsets = [0, 256], sizes = [8, 128], strides = [1, 1]} : vector<8x384xf32> to vector<8x128xf32>
    %208 = vector.extract_strided_slice %198 {offsets = [0, 384], sizes = [8, 128], strides = [1, 1]} : vector<8x512xf32> to vector<8x128xf32>
    %209 = math.tanh %208 : vector<8x128xf32>
    %210 = arith.mulf %206, %186 : vector<8x128xf32>
    %211 = arith.mulf %205, %209 : vector<8x128xf32>
    %212 = arith.addf %210, %211 : vector<8x128xf32>
    %213 = math.tanh %212 : vector<8x128xf32>
    %214 = arith.mulf %207, %213 : vector<8x128xf32>
    %c7_71 = arith.constant 7 : index
    %c0_72 = arith.constant 0 : index
    %c0_73 = arith.constant 0 : index
    %215 = vector.load %arg6[%c7_71, %c0_72, %c0_73] : memref<8x8x128xf32, #tpu.memory_space<vmem>>, vector<1x8x128xf32>
    %216 = vector.shape_cast %215 : vector<1x8x128xf32> to vector<8x128xf32>
    %217 = vector.shape_cast %214 : vector<8x128xf32> to vector<1x8x128xf32>
    tpu.vector_store %arg6[%c7_71, %c0_72, %c0_73], %217 {strides = array<i32>} : memref<8x8x128xf32, #tpu.memory_space<vmem>>, vector<1x8x128xf32>,
    %c0_74 = arith.constant 0 : index
    %c0_75 = arith.constant 0 : index
    %218 = vector.load %arg7[%c0_74, %c0_75] : memref<8x128xf32, #tpu.memory_space<vmem>>, vector<8x128xf32>
    tpu.vector_store %arg7[%c0_74, %c0_75], %214 {strides = array<i32>} : memref<8x128xf32, #tpu.memory_space<vmem>>, vector<8x128xf32>,
    %c0_76 = arith.constant 0 : index
    %c0_77 = arith.constant 0 : index
    %219 = vector.load %arg8[%c0_76, %c0_77] : memref<8x128xf32, #tpu.memory_space<vmem>>, vector<8x128xf32>
    tpu.vector_store %arg8[%c0_76, %c0_77], %212 {strides = array<i32>} : memref<8x128xf32, #tpu.memory_space<vmem>>, vector<8x128xf32>,
    return
  }
  func.func @transform_0(%arg0: i32, %arg1: i32) -> (i32, i32, i32) {
    %c0_i32 = arith.constant 0 : i32
    %c0_i32_0 = arith.constant 0 : i32
    return %arg1, %arg0, %c0_i32 : i32, i32, i32
  }
  func.func @transform_1(%arg0: i32, %arg1: i32) -> (i32, i32) {
    %c0_i32 = arith.constant 0 : i32
    %c0_i32_0 = arith.constant 0 : i32
    %c0_i32_1 = arith.constant 0 : i32
    return %c0_i32, %c0_i32_0 : i32, i32
  }
  func.func @transform_2(%arg0: i32, %arg1: i32) -> (i32, i32) {
    %c0_i32 = arith.constant 0 : i32
    %c0_i32_0 = arith.constant 0 : i32
    %c0_i32_1 = arith.constant 0 : i32
    return %c0_i32, %c0_i32_0 : i32, i32
  }
  func.func @transform_3(%arg0: i32, %arg1: i32) -> (i32, i32) {
    %c0_i32 = arith.constant 0 : i32
    %c0_i32_0 = arith.constant 0 : i32
    %c0_i32_1 = arith.constant 0 : i32
    return %c0_i32, %c0_i32_0 : i32, i32
  }
  func.func @transform_4(%arg0: i32, %arg1: i32) -> (i32, i32, i32) {
    %c0_i32 = arith.constant 0 : i32
    %c0_i32_0 = arith.constant 0 : i32
    return %arg1, %arg0, %c0_i32 : i32, i32, i32
  }
}

</mosaic_0001>

<llo_original>
// kernel: tpu_custom_call.1
$region0: #{tpu_custom_call.1}
  #allocation0 [shape = 'u32[]', space=smem, size = 0x4, offset = 0x4, fixed_abs, tag = 'smem constant byte address 0x4 - core index']
  #allocation1 [shape = 'u32[72,128]{1,0:T(1,128)}', space=vmem, size = 0x9000, scoped, tag = 'internal scratch']
  #allocation2 [shape = 'f32[8,128]{1,0:T(8,128)}', space=vmem, size = 0x1000, scoped, tag = 'scratch operand']
  #allocation3 [shape = 'f32[8,128]{1,0:T(8,128)}', space=vmem, size = 0x1000, scoped, tag = 'scratch operand']
  %s0 = inlined_call_operand.hbm [shape: bf16[8,8,16], index: 0, kind: input, shape index: {}]
  %s1 = inlined_call_operand.hbm [shape: bf16[16,512], index: 1, kind: input, shape index: {}]
  %s2 = inlined_call_operand.hbm [shape: bf16[128,512], index: 2, kind: input, shape index: {}]
  %s3 = inlined_call_operand.hbm [shape: f32[1,512], index: 3, kind: input, shape index: {}]
  %s4 = inlined_call_operand.hbm [shape: f32[8,8,128], index: 4, kind: output, shape index: {}]
  %s5 = sld [smem:[#allocation0]]
  $region46: #{tpu_custom_call.1} parent=0
    _
  %s7 = ssub.s32 1, %s5
  %s8 = scalar_select 0, %s7, %s5
  $region1: #{tpu_custom_call.1} parent=0
    #allocation4 [shape = 'u8[16384]{0}', space=vmem, size = 0x4000, scoped, tag = 'input window, operand 0, single buffered']
    #allocation5 [shape = 's32[1]{0}', space=sflag, size = 0x4, scoped, tag = 'scoped memory for tpu_custom_call.1']
    #allocation6 [shape = 's32[1]{0}', space=sflag, size = 0x4, scoped, tag = 'scoped memory for tpu_custom_call.1']
    #allocation7 [shape = 'u8[16384]{0}', space=vmem, size = 0x4000, scoped, tag = 'input window, operand 1, single buffered']
    #allocation8 [shape = 's32[1]{0}', space=sflag, size = 0x4, scoped, tag = 'scoped memory for tpu_custom_call.1']
    #allocation9 [shape = 'u8[131072]{0}', space=vmem, size = 0x20000, scoped, tag = 'input window, operand 2, single buffered']
    #allocation10 [shape = 'u8[2048]{0}', space=vmem, size = 0x800, scoped, tag = 'input window, operand 3, single buffered']
    #allocation11 [shape = 's32[1]{0}', space=sflag, size = 0x4, scoped, tag = 'scoped memory for tpu_custom_call.1']
    #allocation12 [shape = 'u8[32768]{0}', space=vmem, size = 0x8000, scoped, tag = 'output window, operand 0, single buffered']
    %9 = vsyncpa [#allocation5], 0
    %10 = vsyncpa [#allocation8], 0
    %11 = vsyncpa [#allocation11], 0
    %12 = vsyncpa [#allocation6], 0
    // Predicated region
    $region2: #{tpu_custom_call.1} parent=1 // pred_check
      _
    $region3: #{tpu_custom_call.1} parent=1 // pred_check_branch
      %14 = sbr.rel (0) target = $region5
    $region4: #{tpu_custom_call.1} parent=1 // pred_region
      %16 = vsyncadd [#allocation5], 0
      %s17 = sshll.u32 %s0, 4
      %s18 = int_to_ptr.hbm [resolvable:$true] %s17
      %s19 = sshll.u32 [#allocation4], 4
      %s20 = int_to_ptr.vmem [resolvable:$true] %s19
      %25 = dma.hbm_to_vmem [thread:$0]  %s18, 512, %s20, [#allocation5], 64, 64, 4
    $region5: #{tpu_custom_call.1} parent=1 // pred_fallthru
      _
    // Predicated region
    $region6: #{tpu_custom_call.1} parent=1 // pred_check
      _
    $region7: #{tpu_custom_call.1} parent=1 // pred_check_branch
      %27 = sbr.rel (0) target = $region9
    $region8: #{tpu_custom_call.1} parent=1 // pred_region
      %29 = vsyncadd [#allocation8], 0
      %s30 = sshll.u32 %s1, 4
      %s31 = int_to_ptr.hbm [resolvable:$true] %s30
      %s32 = sshll.u32 [#allocation7], 4
      %s33 = int_to_ptr.vmem [resolvable:$true] %s32
      %38 = dma.hbm_to_vmem [thread:$0]  %s31, 512, %s33, [#allocation8], 256, 256, 16
    $region9: #{tpu_custom_call.1} parent=1 // pred_fallthru
      _
    // Predicated region
    $region10: #{tpu_custom_call.1} parent=1 // pred_check
      _
    $region11: #{tpu_custom_call.1} parent=1 // pred_check_branch
      %40 = sbr.rel (0) target = $region13
    $region12: #{tpu_custom_call.1} parent=1 // pred_region
      %42 = vsyncadd [#allocation8], 0
      %s43 = sshll.u32 %s2, 4
      %s44 = int_to_ptr.hbm [resolvable:$true] %s43
      %s45 = sshll.u32 [#allocation9], 4
      %s46 = int_to_ptr.vmem [resolvable:$true] %s45
      %51 = dma.hbm_to_vmem [thread:$0]  %s44, 4096, %s46, [#allocation8], 256, 256, 16
    $region13: #{tpu_custom_call.1} parent=1 // pred_fallthru
      _
    // Predicated region
    $region14: #{tpu_custom_call.1} parent=1 // pred_check
      _
    $region15: #{tpu_custom_call.1} parent=1 // pred_check_branch
      %53 = sbr.rel (0) target = $region17
    $region16: #{tpu_custom_call.1} parent=1 // pred_region
      %55 = vsyncadd [#allocation11], 0
      %s57 = sshll.u32 %s3, 4
      %s58 = int_to_ptr.hbm [resolvable:$true] %s57
      %s59 = sshll.u32 [#allocation10], 4
      %s60 = int_to_ptr.vmem [resolvable:$true] %s59
      %62 = dma.hbm_to_vmem [thread:$0]  %s58, 64, %s60, [#allocation11]
    $region17: #{tpu_custom_call.1} parent=1 // pred_fallthru
      _
    // Predicated region
    $region18: #{tpu_custom_call.1} parent=1 // pred_check
      _
    $region19: #{tpu_custom_call.1} parent=1 // pred_check_branch
      %64 = sbr.rel (0) target = $region21
    $region20: #{tpu_custom_call.1} parent=1 // pred_region
      %66 = dma.done [#allocation5], 512
    $region21: #{tpu_custom_call.1} parent=1 // pred_fallthru
      _
    // Predicated region
    $region22: #{tpu_custom_call.1} parent=1 // pred_check
      _
    $region23: #{tpu_custom_call.1} parent=1 // pred_check_branch
      %68 = sbr.rel (0) target = $region25
    $region24: #{tpu_custom_call.1} parent=1 // pred_region
      %70 = dma.done [#allocation8], 512
    $region25: #{tpu_custom_call.1} parent=1 // pred_fallthru
      _
    // Predicated region
    $region26: #{tpu_custom_call.1} parent=1 // pred_check
      _
    $region27: #{tpu_custom_call.1} parent=1 // pred_check_branch
      %72 = sbr.rel (0) target = $region29
    $region28: #{tpu_custom_call.1} parent=1 // pred_region
      %74 = dma.done [#allocation8], 4096
    $region29: #{tpu_custom_call.1} parent=1 // pred_fallthru
      _
    // Predicated region
    $region30: #{tpu_custom_call.1} parent=1 // pred_check
      _
    $region31: #{tpu_custom_call.1} parent=1 // pred_check_branch
      %76 = sbr.rel (0) target = $region33
    $region32: #{tpu_custom_call.1} parent=1 // pred_region
      %78 = dma.done [#allocation11], 64
    $region33: #{tpu_custom_call.1} parent=1 // pred_fallthru
      _
    %p80 = scmp.eq.s32.totalorder 0, 0
    // Predicated region
    $region34: #{tpu_custom_call.1} parent=1 // pred_check
      %p81 = pneg %p80
    $region35: #{tpu_custom_call.1} parent=1 // pred_check_branch
      %83 = sbr.rel (%p81) target = $region37
    $region36: #{tpu_custom_call.1} parent=1 // pred_region
      %84 = vst [vmem:[#allocation2] sm:$0xff] 0.0
      %85 = vst [vmem:[#allocation3] sm:$0xff] 0.0
    $region37: #{tpu_custom_call.1} parent=1 // pred_fallthru
      _
    %v86 = vld [vmem:[#allocation7] sm:$0xff]
    %v87 = vld [vmem:[#allocation7 + $0x8] sm:$0xff]
    %v88 = vld [vmem:[#allocation7 + $0x10] sm:$0xff]
    %v89 = vld [vmem:[#allocation7 + $0x18] sm:$0xff]
    %v90 = vld [vmem:[#allocation9] sm:$0xff]
    %v91 = vld [vmem:[#allocation9 + $0x8] sm:$0xff]
    %v92 = vld [vmem:[#allocation9 + $0x10] sm:$0xff]
    %v93 = vld [vmem:[#allocation9 + $0x18] sm:$0xff]
    %v94 = vld [vmem:[#allocation9 + $0x20] sm:$0xff]
    %v95 = vld [vmem:[#allocation9 + $0x28] sm:$0xff]
    %v96 = vld [vmem:[#allocation9 + $0x30] sm:$0xff]
    %v97 = vld [vmem:[#allocation9 + $0x38] sm:$0xff]
    %v98 = vld [vmem:[#allocation9 + $0x40] sm:$0xff]
    %v99 = vld [vmem:[#allocation9 + $0x48] sm:$0xff]
    %v100 = vld [vmem:[#allocation9 + $0x50] sm:$0xff]
    %v101 = vld [vmem:[#allocation9 + $0x58] sm:$0xff]
    %v102 = vld [vmem:[#allocation9 + $0x60] sm:$0xff]
    %v103 = vld [vmem:[#allocation9 + $0x68] sm:$0xff]
    %v104 = vld [vmem:[#allocation9 + $0x70] sm:$0xff]
    %v105 = vld [vmem:[#allocation9 + $0x78] sm:$0xff]
    %v106 = vld [vmem:[#allocation9 + $0x80] sm:$0xff]
    %v107 = vld [vmem:[#allocation9 + $0x88] sm:$0xff]
    %v108 = vld [vmem:[#allocation9 + $0x90] sm:$0xff]
    %v109 = vld [vmem:[#allocation9 + $0x98] sm:$0xff]
    %v110 = vld [vmem:[#allocation9 + $0xa0] sm:$0xff]
    %v111 = vld [vmem:[#allocation9 + $0xa8] sm:$0xff]
    %v112 = vld [vmem:[#allocation9 + $0xb0] sm:$0xff]
    %v113 = vld [vmem:[#allocation9 + $0xb8] sm:$0xff]
    %v114 = vld [vmem:[#allocation9 + $0xc0] sm:$0xff]
    %v115 = vld [vmem:[#allocation9 + $0xc8] sm:$0xff]
    %v116 = vld [vmem:[#allocation9 + $0xd0] sm:$0xff]
    %v117 = vld [vmem:[#allocation9 + $0xd8] sm:$0xff]
    %v118 = vld [vmem:[#allocation9 + $0xe0] sm:$0xff]
    %v119 = vld [vmem:[#allocation9 + $0xe8] sm:$0xff]
    %v120 = vld [vmem:[#allocation9 + $0xf0] sm:$0xff]
    %v121 = vld [vmem:[#allocation9 + $0xf8] sm:$0xff]
    %v122 = vld [vmem:[#allocation10] sm:$0xf]
    %v124 = vperm.slane %v122, 0
    %v125 = vperm.slane %v122, 1
    %v126 = vperm.slane %v122, 2
    %v127 = vperm.slane %v122, 3
    %v132 = vld [vmem:[#allocation2] sm:$0xff]
    %v133 = vld [vmem:[#allocation3] sm:$0xff]
    %v134 = vld [vmem:[#allocation4] sm:$0xf]
    %v135 = vpack.c.bf16 %v132, %v132
    %v168 = vunpack.c.l.b16 %v90
    %v169 = vunpack.c.h.b16 %v90
    %v170 = vunpack.c.l.b16 %v91
    %v171 = vunpack.c.h.b16 %v91
    %v172 = vunpack.c.l.b16 %v92
    %v173 = vunpack.c.h.b16 %v92
    %v174 = vunpack.c.l.b16 %v93
    %v175 = vunpack.c.h.b16 %v93
    %v176 = vunpack.c.l.b16 %v94
    %v177 = vunpack.c.h.b16 %v94
    %v178 = vunpack.c.l.b16 %v95
    %v179 = vunpack.c.h.b16 %v95
    %v180 = vunpack.c.l.b16 %v96
    %v181 = vunpack.c.h.b16 %v96
    %v182 = vunpack.c.l.b16 %v97
    %v183 = vunpack.c.h.b16 %v97
    %v184 = vunpack.c.l.b16 %v98
    %v185 = vunpack.c.h.b16 %v98
    %v186 = vunpack.c.l.b16 %v99
    %v187 = vunpack.c.h.b16 %v99
    %v188 = vunpack.c.l.b16 %v100
    %v189 = vunpack.c.h.b16 %v100
    %v190 = vunpack.c.l.b16 %v101
    %v191 = vunpack.c.h.b16 %v101
    %v192 = vunpack.c.l.b16 %v102
    %v193 = vunpack.c.h.b16 %v102
    %v194 = vunpack.c.l.b16 %v103
    %v195 = vunpack.c.h.b16 %v103
    %v196 = vunpack.c.l.b16 %v104
    %v197 = vunpack.c.h.b16 %v104
    %v198 = vunpack.c.l.b16 %v105
    %v199 = vunpack.c.h.b16 %v105
    %v200 = vunpack.c.l.b16 %v106
    %v201 = vunpack.c.h.b16 %v106
    %v202 = vunpack.c.l.b16 %v107
    %v203 = vunpack.c.h.b16 %v107
    %v204 = vunpack.c.l.b16 %v108
    %v205 = vunpack.c.h.b16 %v108
    %v206 = vunpack.c.l.b16 %v109
    %v207 = vunpack.c.h.b16 %v109
    %v208 = vunpack.c.l.b16 %v110
    %v209 = vunpack.c.h.b16 %v110
    %v210 = vunpack.c.l.b16 %v111
    %v211 = vunpack.c.h.b16 %v111
    %v212 = vunpack.c.l.b16 %v112
    %v213 = vunpack.c.h.b16 %v112
    %v214 = vunpack.c.l.b16 %v113
    %v215 = vunpack.c.h.b16 %v113
    %v216 = vunpack.c.l.b16 %v114
    %v217 = vunpack.c.h.b16 %v114
    %v218 = vunpack.c.l.b16 %v115
    %v219 = vunpack.c.h.b16 %v115
    %v220 = vunpack.c.l.b16 %v116
    %v221 = vunpack.c.h.b16 %v116
    %v222 = vunpack.c.l.b16 %v117
    %v223 = vunpack.c.h.b16 %v117
    %v224 = vunpack.c.l.b16 %v118
    %v225 = vunpack.c.h.b16 %v118
    %v226 = vunpack.c.l.b16 %v119
    %v227 = vunpack.c.h.b16 %v119
    %v228 = vunpack.c.l.b16 %v120
    %v229 = vunpack.c.h.b16 %v120
    %v230 = vunpack.c.l.b16 %v121
    %v231 = vunpack.c.h.b16 %v121
    %v232 = vpack.c.b16 %v172, %v168
    %v233 = vpack.c.b16 %v173, %v169
    %v234 = vpack.c.b16 %v174, %v170
    %v235 = vpack.c.b16 %v175, %v171
    %v236 = vpack.c.b16 %v180, %v176
    %v237 = vpack.c.b16 %v181, %v177
    %v238 = vpack.c.b16 %v182, %v178
    %v239 = vpack.c.b16 %v183, %v179
    %v240 = vpack.c.b16 %v188, %v184
    %v241 = vpack.c.b16 %v189, %v185
    %v242 = vpack.c.b16 %v190, %v186
    %v243 = vpack.c.b16 %v191, %v187
    %v244 = vpack.c.b16 %v196, %v192
    %v245 = vpack.c.b16 %v197, %v193
    %v246 = vpack.c.b16 %v198, %v194
    %v247 = vpack.c.b16 %v199, %v195
    %v248 = vpack.c.b16 %v204, %v200
    %v249 = vpack.c.b16 %v205, %v201
    %v250 = vpack.c.b16 %v206, %v202
    %v251 = vpack.c.b16 %v207, %v203
    %v252 = vpack.c.b16 %v212, %v208
    %v253 = vpack.c.b16 %v213, %v209
    %v254 = vpack.c.b16 %v214, %v210
    %v255 = vpack.c.b16 %v215, %v211
    %v256 = vpack.c.b16 %v220, %v216
    %v257 = vpack.c.b16 %v221, %v217
    %v258 = vpack.c.b16 %v222, %v218
    %v259 = vpack.c.b16 %v223, %v219
    %v260 = vpack.c.b16 %v228, %v224
    %v261 = vpack.c.b16 %v229, %v225
    %v262 = vpack.c.b16 %v230, %v226
    %v263 = vpack.c.b16 %v231, %v227
    %296 = vmatpush.bf16.msra.mxu0 %v260
    %297 = vmatpush.bf16.msra.mxu0 %v256
    %298 = vmatpush.bf16.msra.mxu0 %v252
    %299 = vmatpush.bf16.msra.mxu0 %v248
    %300 = vmatpush.bf16.msra.mxu0 %v244
    %301 = vmatpush.bf16.msra.mxu0 %v240
    %302 = vmatpush.bf16.msra.mxu0 %v236
    %303 = vmatpush.bf16.msra.mxu0 %v232
    %304 = vmatmul.bf16.gmra.mxu0 %v135
    %v305 = vpop.f32.mrf.mxu0
    %v306 = vadd.f32 0.0, %v305
    %v307 = vpop.f32.mrf.mxu0
    %308 = vdwg.mxu0
    %309 = vmatpush.bf16.msra.mxu0 %v261
    %310 = vmatpush.bf16.msra.mxu0 %v257
    %311 = vmatpush.bf16.msra.mxu0 %v253
    %312 = vmatpush.bf16.msra.mxu0 %v249
    %313 = vmatpush.bf16.msra.mxu0 %v245
    %314 = vmatpush.bf16.msra.mxu0 %v241
    %315 = vmatpush.bf16.msra.mxu0 %v237
    %316 = vmatpush.bf16.msra.mxu0 %v233
    %317 = vmatmul.bf16.gmra.mxu0 %v135
    %v318 = vpop.f32.mrf.mxu0
    %v319 = vadd.f32 0.0, %v318
    %v320 = vpop.f32.mrf.mxu0
    %321 = vdwg.mxu0
    %322 = vmatpush.bf16.msra.mxu0 %v262
    %323 = vmatpush.bf16.msra.mxu0 %v258
    %324 = vmatpush.bf16.msra.mxu0 %v254
    %325 = vmatpush.bf16.msra.mxu0 %v250
    %326 = vmatpush.bf16.msra.mxu0 %v246
    %327 = vmatpush.bf16.msra.mxu0 %v242
    %328 = vmatpush.bf16.msra.mxu0 %v238
    %329 = vmatpush.bf16.msra.mxu0 %v234
    %330 = vmatmul.bf16.gmra.mxu0 %v135
    %v331 = vpop.f32.mrf.mxu0
    %v332 = vadd.f32 0.0, %v331
    %v333 = vpop.f32.mrf.mxu0
    %334 = vdwg.mxu0
    %335 = vmatpush.bf16.msra.mxu0 %v263
    %336 = vmatpush.bf16.msra.mxu0 %v259
    %337 = vmatpush.bf16.msra.mxu0 %v255
    %338 = vmatpush.bf16.msra.mxu0 %v251
    %339 = vmatpush.bf16.msra.mxu0 %v247
    %340 = vmatpush.bf16.msra.mxu0 %v243
    %341 = vmatpush.bf16.msra.mxu0 %v239
    %342 = vmatpush.bf16.msra.mxu0 %v235
    %343 = vmatmul.bf16.gmra.mxu0 %v135
    %v344 = vpop.f32.mrf.mxu0
    %v345 = vadd.f32 0.0, %v344
    %v346 = vpop.f32.mrf.mxu0
    %347 = vdwg.mxu0
    %v352 = vunpack.c.l.b16 %v86
    %v353 = vunpack.c.h.b16 %v86
    %v354 = vunpack.c.l.b16 %v87
    %v355 = vunpack.c.h.b16 %v87
    %v356 = vunpack.c.l.b16 %v88
    %v357 = vunpack.c.h.b16 %v88
    %v358 = vunpack.c.l.b16 %v89
    %v359 = vunpack.c.h.b16 %v89
    %v360 = vpack.c.b16 %v356, %v352
    %v361 = vpack.c.b16 %v357, %v353
    %v362 = vpack.c.b16 %v358, %v354
    %v363 = vpack.c.b16 %v359, %v355
    %vm368 = vcmask 130048
    %v370 = vsel %vm368, %v134, 0
    %372 = vmatpush.bf16.msra.mxu0 0
    %373 = vmatpush.bf16.msra.mxu0 0
    %374 = vmatpush.bf16.msra.mxu0 0
    %375 = vmatpush.bf16.msra.mxu0 0
    %376 = vmatpush.bf16.msra.mxu0 0
    %377 = vmatpush.bf16.msra.mxu0 0
    %378 = vmatpush.bf16.msra.mxu0 0
    %379 = vmatpush.bf16.msra.mxu0 %v360
    %380 = vmatmul.bf16.gmra.mxu0 %v370
    %v381 = vpop.f32.mrf.mxu0
    %v382 = vadd.f32 %v306, %v381
    %v383 = vpop.f32.mrf.mxu0
    %384 = vdwg.mxu0
    %385 = vmatpush.bf16.msra.mxu0 0
    %386 = vmatpush.bf16.msra.mxu0 0
    %387 = vmatpush.bf16.msra.mxu0 0
    %388 = vmatpush.bf16.msra.mxu0 0
    %389 = vmatpush.bf16.msra.mxu0 0
    %390 = vmatpush.bf16.msra.mxu0 0
    %391 = vmatpush.bf16.msra.mxu0 0
    %392 = vmatpush.bf16.msra.mxu0 %v361
    %393 = vmatmul.bf16.gmra.mxu0 %v370
    %v394 = vpop.f32.mrf.mxu0
    %v395 = vadd.f32 %v319, %v394
    %v396 = vpop.f32.mrf.mxu0
    %397 = vdwg.mxu0
    %398 = vmatpush.bf16.msra.mxu0 0
    %399 = vmatpush.bf16.msra.mxu0 0
    %400 = vmatpush.bf16.msra.mxu0 0
    %401 = vmatpush.bf16.msra.mxu0 0
    %402 = vmatpush.bf16.msra.mxu0 0
    %403 = vmatpush.bf16.msra.mxu0 0
    %404 = vmatpush.bf16.msra.mxu0 0
    %405 = vmatpush.bf16.msra.mxu0 %v362
    %406 = vmatmul.bf16.gmra.mxu0 %v370
    %v407 = vpop.f32.mrf.mxu0
    %v408 = vadd.f32 %v332, %v407
    %v409 = vpop.f32.mrf.mxu0
    %410 = vdwg.mxu0
    %411 = vmatpush.bf16.msra.mxu0 0
    %412 = vmatpush.bf16.msra.mxu0 0
    %413 = vmatpush.bf16.msra.mxu0 0
    %414 = vmatpush.bf16.msra.mxu0 0
    %415 = vmatpush.bf16.msra.mxu0 0
    %416 = vmatpush.bf16.msra.mxu0 0
    %417 = vmatpush.bf16.msra.mxu0 0
    %418 = vmatpush.bf16.msra.mxu0 %v363
    %419 = vmatmul.bf16.gmra.mxu0 %v370
    %v420 = vpop.f32.mrf.mxu0
    %v421 = vadd.f32 %v345, %v420
    %v422 = vpop.f32.mrf.mxu0
    %423 = vdwg.mxu0
    %v424 = vadd.f32 %v382, %v124
    %v425 = vadd.f32 %v395, %v125
    %v426 = vadd.f32 %v408, %v126
    %v427 = vadd.f32 %v421, %v127
    %v428 = vxor.u32 %v424, 2147483648
    %v429 = vxor.u32 %v425, 2147483648
    %v430 = vxor.u32 %v426, 2147483648
    %v431 = vmul.f32 %v428, 1.442695
    %v432 = vpow.pop %v431
    %v433 = vmul.f32 %v429, 1.442695
    %v434 = vpow.pop %v433
    %v435 = vmul.f32 %v430, 1.442695
    %v436 = vpow.pop %v435
    %v437 = vadd.f32 %v432, 1.0
    %v438 = vadd.f32 %v434, 1.0
    %v439 = vadd.f32 %v436, 1.0
    %v440 = vrcp.pop %v437
    %v441 = vmul.f32 %v437, %v440
    %v442 = vsub.f32 1.0, %v441
    %v443 = vmul.f32 %v440, %v442
    %v444 = vadd.f32 %v440, %v443
    %vm445 = vweird.f32 %v437
    %vm446 = vweird.f32 %v440
    %vm447 = vmor %vm445, %vm446
    %v448 = vsel %vm447, %v440, %v444
    %v449 = vand.u32 2147483647, %v437
    %vm450 = vcmp.eq.f32.partialorder %v449, 8.507059e+37
    %v451 = vand.u32 %v437, 2147483648
    %v452 = vor.u32 1.1754944e-38, %v451
    %v453 = vsel %vm450, %v452, %v448
    %v454 = vmul.f32 1.0, %v453
    %v455 = vrcp.pop %v438
    %v456 = vmul.f32 %v438, %v455
    %v457 = vsub.f32 1.0, %v456
    %v458 = vmul.f32 %v455, %v457
    %v459 = vadd.f32 %v455, %v458
    %vm460 = vweird.f32 %v438
    %vm461 = vweird.f32 %v455
    %vm462 = vmor %vm460, %vm461
    %v463 = vsel %vm462, %v455, %v459
    %v464 = vand.u32 2147483647, %v438
    %vm465 = vcmp.eq.f32.partialorder %v464, 8.507059e+37
    %v466 = vand.u32 %v438, 2147483648
    %v467 = vor.u32 1.1754944e-38, %v466
    %v468 = vsel %vm465, %v467, %v463
    %v469 = vmul.f32 1.0, %v468
    %v470 = vrcp.pop %v439
    %v471 = vmul.f32 %v439, %v470
    %v472 = vsub.f32 1.0, %v471
    %v473 = vmul.f32 %v470, %v472
    %v474 = vadd.f32 %v470, %v473
    %vm475 = vweird.f32 %v439
    %vm476 = vweird.f32 %v470
    %vm477 = vmor %vm475, %vm476
    %v478 = vsel %vm477, %v470, %v474
    %v479 = vand.u32 2147483647, %v439
    %vm480 = vcmp.eq.f32.partialorder %v479, 8.507059e+37
    %v481 = vand.u32 %v439, 2147483648
    %v482 = vor.u32 1.1754944e-38, %v481
    %v483 = vsel %vm480, %v482, %v478
    %v484 = vmul.f32 1.0, %v483
    %v485 = vtanh.pop %v427
    %v486 = vmul.f32 %v469, %v133
    %v487 = vmul.f32 %v454, %v485
    %v488 = vadd.f32 %v486, %v487
    %v489 = vtanh.pop %v488
    %v490 = vmul.f32 %v484, %v489
    %491 = vst [vmem:[#allocation12] sm:$0xff] %v490
    %s492 = scalar_lea.vmem [#allocation4], 4
    %v493 = vld [vmem:[%s492] sm:$0xf]
    %v494 = vpack.c.bf16 %v490, %v490
    %495 = vmatpush.bf16.msra.mxu0 %v260
    %496 = vmatpush.bf16.msra.mxu0 %v256
    %497 = vmatpush.bf16.msra.mxu0 %v252
    %498 = vmatpush.bf16.msra.mxu0 %v248
    %499 = vmatpush.bf16.msra.mxu0 %v244
    %500 = vmatpush.bf16.msra.mxu0 %v240
    %501 = vmatpush.bf16.msra.mxu0 %v236
    %502 = vmatpush.bf16.msra.mxu0 %v232
    %503 = vmatmul.bf16.gmra.mxu0 %v494
    %v504 = vpop.f32.mrf.mxu0
    %v505 = vadd.f32 0.0, %v504
    %v506 = vpop.f32.mrf.mxu0
    %507 = vdwg.mxu0
    %508 = vmatpush.bf16.msra.mxu0 %v261
    %509 = vmatpush.bf16.msra.mxu0 %v257
    %510 = vmatpush.bf16.msra.mxu0 %v253
    %511 = vmatpush.bf16.msra.mxu0 %v249
    %512 = vmatpush.bf16.msra.mxu0 %v245
    %513 = vmatpush.bf16.msra.mxu0 %v241
    %514 = vmatpush.bf16.msra.mxu0 %v237
    %515 = vmatpush.bf16.msra.mxu0 %v233
    %516 = vmatmul.bf16.gmra.mxu0 %v494
    %v517 = vpop.f32.mrf.mxu0
    %v518 = vadd.f32 0.0, %v517
    %v519 = vpop.f32.mrf.mxu0
    %520 = vdwg.mxu0
    %521 = vmatpush.bf16.msra.mxu0 %v262
    %522 = vmatpush.bf16.msra.mxu0 %v258
    %523 = vmatpush.bf16.msra.mxu0 %v254
    %524 = vmatpush.bf16.msra.mxu0 %v250
    %525 = vmatpush.bf16.msra.mxu0 %v246
    %526 = vmatpush.bf16.msra.mxu0 %v242
    %527 = vmatpush.bf16.msra.mxu0 %v238
    %528 = vmatpush.bf16.msra.mxu0 %v234
    %529 = vmatmul.bf16.gmra.mxu0 %v494
    %v530 = vpop.f32.mrf.mxu0
    %v531 = vadd.f32 0.0, %v530
    %v532 = vpop.f32.mrf.mxu0
    %533 = vdwg.mxu0
    %534 = vmatpush.bf16.msra.mxu0 %v263
    %535 = vmatpush.bf16.msra.mxu0 %v259
    %536 = vmatpush.bf16.msra.mxu0 %v255
    %537 = vmatpush.bf16.msra.mxu0 %v251
    %538 = vmatpush.bf16.msra.mxu0 %v247
    %539 = vmatpush.bf16.msra.mxu0 %v243
    %540 = vmatpush.bf16.msra.mxu0 %v239
    %541 = vmatpush.bf16.msra.mxu0 %v235
    %542 = vmatmul.bf16.gmra.mxu0 %v494
    %v543 = vpop.f32.mrf.mxu0
    %v544 = vadd.f32 0.0, %v543
    %v545 = vpop.f32.mrf.mxu0
    %546 = vdwg.mxu0
    %v548 = vsel %vm368, %v493, 0
    %550 = vmatpush.bf16.msra.mxu0 0
    %551 = vmatpush.bf16.msra.mxu0 0
    %552 = vmatpush.bf16.msra.mxu0 0
    %553 = vmatpush.bf16.msra.mxu0 0
    %554 = vmatpush.bf16.msra.mxu0 0
    %555 = vmatpush.bf16.msra.mxu0 0
    %556 = vmatpush.bf16.msra.mxu0 0
    %557 = vmatpush.bf16.msra.mxu0 %v360
    %558 = vmatmul.bf16.gmra.mxu0 %v548
    %v559 = vpop.f32.mrf.mxu0
    %v560 = vadd.f32 %v505, %v559
    %v561 = vpop.f32.mrf.mxu0
    %562 = vdwg.mxu0
    %563 = vmatpush.bf16.msra.mxu0 0
    %564 = vmatpush.bf16.msra.mxu0 0
    %565 = vmatpush.bf16.msra.mxu0 0
    %566 = vmatpush.bf16.msra.mxu0 0
    %567 = vmatpush.bf16.msra.mxu0 0
    %568 = vmatpush.bf16.msra.mxu0 0
    %569 = vmatpush.bf16.msra.mxu0 0
    %570 = vmatpush.bf16.msra.mxu0 %v361
    %571 = vmatmul.bf16.gmra.mxu0 %v548
    %v572 = vpop.f32.mrf.mxu0
    %v573 = vadd.f32 %v518, %v572
    %v574 = vpop.f32.mrf.mxu0
    %575 = vdwg.mxu0
    %576 = vmatpush.bf16.msra.mxu0 0
    %577 = vmatpush.bf16.msra.mxu0 0
    %578 = vmatpush.bf16.msra.mxu0 0
    %579 = vmatpush.bf16.msra.mxu0 0
    %580 = vmatpush.bf16.msra.mxu0 0
    %581 = vmatpush.bf16.msra.mxu0 0
    %582 = vmatpush.bf16.msra.mxu0 0
    %583 = vmatpush.bf16.msra.mxu0 %v362
    %584 = vmatmul.bf16.gmra.mxu0 %v548
    %v585 = vpop.f32.mrf.mxu0
    %v586 = vadd.f32 %v531, %v585
    %v587 = vpop.f32.mrf.mxu0
    %588 = vdwg.mxu0
    %589 = vmatpush.bf16.msra.mxu0 0
    %590 = vmatpush.bf16.msra.mxu0 0
    %591 = vmatpush.bf16.msra.mxu0 0
    %592 = vmatpush.bf16.msra.mxu0 0
    %593 = vmatpush.bf16.msra.mxu0 0
    %594 = vmatpush.bf16.msra.mxu0 0
    %595 = vmatpush.bf16.msra.mxu0 0
    %596 = vmatpush.bf16.msra.mxu0 %v363
    %597 = vmatmul.bf16.gmra.mxu0 %v548
    %v598 = vpop.f32.mrf.mxu0
    %v599 = vadd.f32 %v544, %v598
    %v600 = vpop.f32.mrf.mxu0
    %601 = vdwg.mxu0
    %v602 = vadd.f32 %v560, %v124
    %v603 = vadd.f32 %v573, %v125
    %v604 = vadd.f32 %v586, %v126
    %v605 = vadd.f32 %v599, %v127
    %v606 = vxor.u32 %v602, 2147483648
    %v607 = vxor.u32 %v603, 2147483648
    %v608 = vxor.u32 %v604, 2147483648
    %v609 = vmul.f32 %v606, 1.442695
    %v610 = vpow.pop %v609
    %v611 = vmul.f32 %v607, 1.442695
    %v612 = vpow.pop %v611
    %v613 = vmul.f32 %v608, 1.442695
    %v614 = vpow.pop %v613
    %v615 = vadd.f32 %v610, 1.0
    %v616 = vadd.f32 %v612, 1.0
    %v617 = vadd.f32 %v614, 1.0
    %v618 = vrcp.pop %v615
    %v619 = vmul.f32 %v615, %v618
    %v620 = vsub.f32 1.0, %v619
    %v621 = vmul.f32 %v618, %v620
    %v622 = vadd.f32 %v618, %v621
    %vm623 = vweird.f32 %v615
    %vm624 = vweird.f32 %v618
    %vm625 = vmor %vm623, %vm624
    %v626 = vsel %vm625, %v618, %v622
    %v627 = vand.u32 2147483647, %v615
    %vm628 = vcmp.eq.f32.partialorder %v627, 8.507059e+37
    %v629 = vand.u32 %v615, 2147483648
    %v630 = vor.u32 1.1754944e-38, %v629
    %v631 = vsel %vm628, %v630, %v626
    %v632 = vmul.f32 1.0, %v631
    %v633 = vrcp.pop %v616
    %v634 = vmul.f32 %v616, %v633
    %v635 = vsub.f32 1.0, %v634
    %v636 = vmul.f32 %v633, %v635
    %v637 = vadd.f32 %v633, %v636
    %vm638 = vweird.f32 %v616
    %vm639 = vweird.f32 %v633
    %vm640 = vmor %vm638, %vm639
    %v641 = vsel %vm640, %v633, %v637
    %v642 = vand.u32 2147483647, %v616
    %vm643 = vcmp.eq.f32.partialorder %v642, 8.507059e+37
    %v644 = vand.u32 %v616, 2147483648
    %v645 = vor.u32 1.1754944e-38, %v644
    %v646 = vsel %vm643, %v645, %v641
    %v647 = vmul.f32 1.0, %v646
    %v648 = vrcp.pop %v617
    %v649 = vmul.f32 %v617, %v648
    %v650 = vsub.f32 1.0, %v649
    %v651 = vmul.f32 %v648, %v650
    %v652 = vadd.f32 %v648, %v651
    %vm653 = vweird.f32 %v617
    %vm654 = vweird.f32 %v648
    %vm655 = vmor %vm653, %vm654
    %v656 = vsel %vm655, %v648, %v652
    %v657 = vand.u32 2147483647, %v617
    %vm658 = vcmp.eq.f32.partialorder %v657, 8.507059e+37
    %v659 = vand.u32 %v617, 2147483648
    %v660 = vor.u32 1.1754944e-38, %v659
    %v661 = vsel %vm658, %v660, %v656
    %v662 = vmul.f32 1.0, %v661
    %v663 = vtanh.pop %v605
    %v664 = vmul.f32 %v647, %v488
    %v665 = vmul.f32 %v632, %v663
    %v666 = vadd.f32 %v664, %v665
    %v667 = vtanh.pop %v666
    %v668 = vmul.f32 %v662, %v667
    %s669 = scalar_lea.vmem [#allocation12], 8
    %670 = vst [vmem:[%s669] sm:$0xff] %v668
    %s671 = scalar_lea.vmem [#allocation4], 8
    %v672 = vld [vmem:[%s671] sm:$0xf]
    %v673 = vpack.c.bf16 %v668, %v668
    %674 = vmatpush.bf16.msra.mxu0 %v260
    %675 = vmatpush.bf16.msra.mxu0 %v256
    %676 = vmatpush.bf16.msra.mxu0 %v252
    %677 = vmatpush.bf16.msra.mxu0 %v248
    %678 = vmatpush.bf16.msra.mxu0 %v244
    %679 = vmatpush.bf16.msra.mxu0 %v240
    %680 = vmatpush.bf16.msra.mxu0 %v236
    %681 = vmatpush.bf16.msra.mxu0 %v232
    %682 = vmatmul.bf16.gmra.mxu0 %v673
    %v683 = vpop.f32.mrf.mxu0
    %v684 = vadd.f32 0.0, %v683
    %v685 = vpop.f32.mrf.mxu0
    %686 = vdwg.mxu0
    %687 = vmatpush.bf16.msra.mxu0 %v261
    %688 = vmatpush.bf16.msra.mxu0 %v257
    %689 = vmatpush.bf16.msra.mxu0 %v253
    %690 = vmatpush.bf16.msra.mxu0 %v249
    %691 = vmatpush.bf16.msra.mxu0 %v245
    %692 = vmatpush.bf16.msra.mxu0 %v241
    %693 = vmatpush.bf16.msra.mxu0 %v237
    %694 = vmatpush.bf16.msra.mxu0 %v233
    %695 = vmatmul.bf16.gmra.mxu0 %v673
    %v696 = vpop.f32.mrf.mxu0
    %v697 = vadd.f32 0.0, %v696
    %v698 = vpop.f32.mrf.mxu0
    %699 = vdwg.mxu0
    %700 = vmatpush.bf16.msra.mxu0 %v262
    %701 = vmatpush.bf16.msra.mxu0 %v258
    %702 = vmatpush.bf16.msra.mxu0 %v254
    %703 = vmatpush.bf16.msra.mxu0 %v250
    %704 = vmatpush.bf16.msra.mxu0 %v246
    %705 = vmatpush.bf16.msra.mxu0 %v242
    %706 = vmatpush.bf16.msra.mxu0 %v238
    %707 = vmatpush.bf16.msra.mxu0 %v234
    %708 = vmatmul.bf16.gmra.mxu0 %v673
    %v709 = vpop.f32.mrf.mxu0
    %v710 = vadd.f32 0.0, %v709
    %v711 = vpop.f32.mrf.mxu0
    %712 = vdwg.mxu0
    %713 = vmatpush.bf16.msra.mxu0 %v263
    %714 = vmatpush.bf16.msra.mxu0 %v259
    %715 = vmatpush.bf16.msra.mxu0 %v255
    %716 = vmatpush.bf16.msra.mxu0 %v251
    %717 = vmatpush.bf16.msra.mxu0 %v247
    %718 = vmatpush.bf16.msra.mxu0 %v243
    %719 = vmatpush.bf16.msra.mxu0 %v239
    %720 = vmatpush.bf16.msra.mxu0 %v235
    %721 = vmatmul.bf16.gmra.mxu0 %v673
    %v722 = vpop.f32.mrf.mxu0
    %v723 = vadd.f32 0.0, %v722
    %v724 = vpop.f32.mrf.mxu0
    %725 = vdwg.mxu0
    %v727 = vsel %vm368, %v672, 0
    %729 = vmatpush.bf16.msra.mxu0 0
    %730 = vmatpush.bf16.msra.mxu0 0
    %731 = vmatpush.bf16.msra.mxu0 0
    %732 = vmatpush.bf16.msra.mxu0 0
    %733 = vmatpush.bf16.msra.mxu0 0
    %734 = vmatpush.bf16.msra.mxu0 0
    %735 = vmatpush.bf16.msra.mxu0 0
    %736 = vmatpush.bf16.msra.mxu0 %v360
    %737 = vmatmul.bf16.gmra.mxu0 %v727
    %v738 = vpop.f32.mrf.mxu0
    %v739 = vadd.f32 %v684, %v738
    %v740 = vpop.f32.mrf.mxu0
    %741 = vdwg.mxu0
    %742 = vmatpush.bf16.msra.mxu0 0
    %743 = vmatpush.bf16.msra.mxu0 0
    %744 = vmatpush.bf16.msra.mxu0 0
    %745 = vmatpush.bf16.msra.mxu0 0
    %746 = vmatpush.bf16.msra.mxu0 0
    %747 = vmatpush.bf16.msra.mxu0 0
    %748 = vmatpush.bf16.msra.mxu0 0
    %749 = vmatpush.bf16.msra.mxu0 %v361
    %750 = vmatmul.bf16.gmra.mxu0 %v727
    %v751 = vpop.f32.mrf.mxu0
    %v752 = vadd.f32 %v697, %v751
    %v753 = vpop.f32.mrf.mxu0
    %754 = vdwg.mxu0
    %755 = vmatpush.bf16.msra.mxu0 0
    %756 = vmatpush.bf16.msra.mxu0 0
    %757 = vmatpush.bf16.msra.mxu0 0
    %758 = vmatpush.bf16.msra.mxu0 0
    %759 = vmatpush.bf16.msra.mxu0 0
    %760 = vmatpush.bf16.msra.mxu0 0
    %761 = vmatpush.bf16.msra.mxu0 0
    %762 = vmatpush.bf16.msra.mxu0 %v362
    %763 = vmatmul.bf16.gmra.mxu0 %v727
    %v764 = vpop.f32.mrf.mxu0
    %v765 = vadd.f32 %v710, %v764
    %v766 = vpop.f32.mrf.mxu0
    %767 = vdwg.mxu0
    %768 = vmatpush.bf16.msra.mxu0 0
    %769 = vmatpush.bf16.msra.mxu0 0
    %770 = vmatpush.bf16.msra.mxu0 0
    %771 = vmatpush.bf16.msra.mxu0 0
    %772 = vmatpush.bf16.msra.mxu0 0
    %773 = vmatpush.bf16.msra.mxu0 0
    %774 = vmatpush.bf16.msra.mxu0 0
    %775 = vmatpush.bf16.msra.mxu0 %v363
    %776 = vmatmul.bf16.gmra.mxu0 %v727
    %v777 = vpop.f32.mrf.mxu0
    %v778 = vadd.f32 %v723, %v777
    %v779 = vpop.f32.mrf.mxu0
    %780 = vdwg.mxu0
    %v781 = vadd.f32 %v739, %v124
    %v782 = vadd.f32 %v752, %v125
    %v783 = vadd.f32 %v765, %v126
    %v784 = vadd.f32 %v778, %v127
    %v785 = vxor.u32 %v781, 2147483648
    %v786 = vxor.u32 %v782, 2147483648
    %v787 = vxor.u32 %v783, 2147483648
    %v788 = vmul.f32 %v785, 1.442695
    %v789 = vpow.pop %v788
    %v790 = vmul.f32 %v786, 1.442695
    %v791 = vpow.pop %v790
    %v792 = vmul.f32 %v787, 1.442695
    %v793 = vpow.pop %v792
    %v794 = vadd.f32 %v789, 1.0
    %v795 = vadd.f32 %v791, 1.0
    %v796 = vadd.f32 %v793, 1.0
    %v797 = vrcp.pop %v794
    %v798 = vmul.f32 %v794, %v797
    %v799 = vsub.f32 1.0, %v798
    %v800 = vmul.f32 %v797, %v799
    %v801 = vadd.f32 %v797, %v800
    %vm802 = vweird.f32 %v794
    %vm803 = vweird.f32 %v797
    %vm804 = vmor %vm802, %vm803
    %v805 = vsel %vm804, %v797, %v801
    %v806 = vand.u32 2147483647, %v794
    %vm807 = vcmp.eq.f32.partialorder %v806, 8.507059e+37
    %v808 = vand.u32 %v794, 2147483648
    %v809 = vor.u32 1.1754944e-38, %v808
    %v810 = vsel %vm807, %v809, %v805
    %v811 = vmul.f32 1.0, %v810
    %v812 = vrcp.pop %v795
    %v813 = vmul.f32 %v795, %v812
    %v814 = vsub.f32 1.0, %v813
    %v815 = vmul.f32 %v812, %v814
    %v816 = vadd.f32 %v812, %v815
    %vm817 = vweird.f32 %v795
    %vm818 = vweird.f32 %v812
    %vm819 = vmor %vm817, %vm818
    %v820 = vsel %vm819, %v812, %v816
    %v821 = vand.u32 2147483647, %v795
    %vm822 = vcmp.eq.f32.partialorder %v821, 8.507059e+37
    %v823 = vand.u32 %v795, 2147483648
    %v824 = vor.u32 1.1754944e-38, %v823
    %v825 = vsel %vm822, %v824, %v820
    %v826 = vmul.f32 1.0, %v825
    %v827 = vrcp.pop %v796
    %v828 = vmul.f32 %v796, %v827
    %v829 = vsub.f32 1.0, %v828
    %v830 = vmul.f32 %v827, %v829
    %v831 = vadd.f32 %v827, %v830
    %vm832 = vweird.f32 %v796
    %vm833 = vweird.f32 %v827
    %vm834 = vmor %vm832, %vm833
    %v835 = vsel %vm834, %v827, %v831
    %v836 = vand.u32 2147483647, %v796
    %vm837 = vcmp.eq.f32.partialorder %v836, 8.507059e+37
    %v838 = vand.u32 %v796, 2147483648
    %v839 = vor.u32 1.1754944e-38, %v838
    %v840 = vsel %vm837, %v839, %v835
    %v841 = vmul.f32 1.0, %v840
    %v842 = vtanh.pop %v784
    %v843 = vmul.f32 %v826, %v666
    %v844 = vmul.f32 %v811, %v842
    %v845 = vadd.f32 %v843, %v844
    %v846 = vtanh.pop %v845
    %v847 = vmul.f32 %v841, %v846
    %s848 = scalar_lea.vmem [#allocation12], 16
    %849 = vst [vmem:[%s848] sm:$0xff] %v847
    %s850 = scalar_lea.vmem [#allocation4], 12
    %v851 = vld [vmem:[%s850] sm:$0xf]
    %v852 = vpack.c.bf16 %v847, %v847
    %853 = vmatpush.bf16.msra.mxu0 %v260
    %854 = vmatpush.bf16.msra.mxu0 %v256
    %855 = vmatpush.bf16.msra.mxu0 %v252
    %856 = vmatpush.bf16.msra.mxu0 %v248
    %857 = vmatpush.bf16.msra.mxu0 %v244
    %858 = vmatpush.bf16.msra.mxu0 %v240
    %859 = vmatpush.bf16.msra.mxu0 %v236
    %860 = vmatpush.bf16.msra.mxu0 %v232
    %861 = vmatmul.bf16.gmra.mxu0 %v852
    %v862 = vpop.f32.mrf.mxu0
    %v863 = vadd.f32 0.0, %v862
    %v864 = vpop.f32.mrf.mxu0
    %865 = vdwg.mxu0
    %866 = vmatpush.bf16.msra.mxu0 %v261
    %867 = vmatpush.bf16.msra.mxu0 %v257
    %868 = vmatpush.bf16.msra.mxu0 %v253
    %869 = vmatpush.bf16.msra.mxu0 %v249
    %870 = vmatpush.bf16.msra.mxu0 %v245
    %871 = vmatpush.bf16.msra.mxu0 %v241
    %872 = vmatpush.bf16.msra.mxu0 %v237
    %873 = vmatpush.bf16.msra.mxu0 %v233
    %874 = vmatmul.bf16.gmra.mxu0 %v852
    %v875 = vpop.f32.mrf.mxu0
    %v876 = vadd.f32 0.0, %v875
    %v877 = vpop.f32.mrf.mxu0
    %878 = vdwg.mxu0
    %879 = vmatpush.bf16.msra.mxu0 %v262
    %880 = vmatpush.bf16.msra.mxu0 %v258
    %881 = vmatpush.bf16.msra.mxu0 %v254
    %882 = vmatpush.bf16.msra.mxu0 %v250
    %883 = vmatpush.bf16.msra.mxu0 %v246
    %884 = vmatpush.bf16.msra.mxu0 %v242
    %885 = vmatpush.bf16.msra.mxu0 %v238
    %886 = vmatpush.bf16.msra.mxu0 %v234
    %887 = vmatmul.bf16.gmra.mxu0 %v852
    %v888 = vpop.f32.mrf.mxu0
    %v889 = vadd.f32 0.0, %v888
    %v890 = vpop.f32.mrf.mxu0
    %891 = vdwg.mxu0
    %892 = vmatpush.bf16.msra.mxu0 %v263
    %893 = vmatpush.bf16.msra.mxu0 %v259
    %894 = vmatpush.bf16.msra.mxu0 %v255
    %895 = vmatpush.bf16.msra.mxu0 %v251
    %896 = vmatpush.bf16.msra.mxu0 %v247
    %897 = vmatpush.bf16.msra.mxu0 %v243
    %898 = vmatpush.bf16.msra.mxu0 %v239
    %899 = vmatpush.bf16.msra.mxu0 %v235
    %900 = vmatmul.bf16.gmra.mxu0 %v852
    %v901 = vpop.f32.mrf.mxu0
    %v902 = vadd.f32 0.0, %v901
    %v903 = vpop.f32.mrf.mxu0
    %904 = vdwg.mxu0
    %v906 = vsel %vm368, %v851, 0
    %908 = vmatpush.bf16.msra.mxu0 0
    %909 = vmatpush.bf16.msra.mxu0 0
    %910 = vmatpush.bf16.msra.mxu0 0
    %911 = vmatpush.bf16.msra.mxu0 0
    %912 = vmatpush.bf16.msra.mxu0 0
    %913 = vmatpush.bf16.msra.mxu0 0
    %914 = vmatpush.bf16.msra.mxu0 0
    %915 = vmatpush.bf16.msra.mxu0 %v360
    %916 = vmatmul.bf16.gmra.mxu0 %v906
    %v917 = vpop.f32.mrf.mxu0
    %v918 = vadd.f32 %v863, %v917
    %v919 = vpop.f32.mrf.mxu0
    %920 = vdwg.mxu0
    %921 = vmatpush.bf16.msra.mxu0 0
    %922 = vmatpush.bf16.msra.mxu0 0
    %923 = vmatpush.bf16.msra.mxu0 0
    %924 = vmatpush.bf16.msra.mxu0 0
    %925 = vmatpush.bf16.msra.mxu0 0
    %926 = vmatpush.bf16.msra.mxu0 0
    %927 = vmatpush.bf16.msra.mxu0 0
    %928 = vmatpush.bf16.msra.mxu0 %v361
    %929 = vmatmul.bf16.gmra.mxu0 %v906
    %v930 = vpop.f32.mrf.mxu0
    %v931 = vadd.f32 %v876, %v930
    %v932 = vpop.f32.mrf.mxu0
    %933 = vdwg.mxu0
    %934 = vmatpush.bf16.msra.mxu0 0
    %935 = vmatpush.bf16.msra.mxu0 0
    %936 = vmatpush.bf16.msra.mxu0 0
    %937 = vmatpush.bf16.msra.mxu0 0
    %938 = vmatpush.bf16.msra.mxu0 0
    %939 = vmatpush.bf16.msra.mxu0 0
    %940 = vmatpush.bf16.msra.mxu0 0
    %941 = vmatpush.bf16.msra.mxu0 %v362
    %942 = vmatmul.bf16.gmra.mxu0 %v906
    %v943 = vpop.f32.mrf.mxu0
    %v944 = vadd.f32 %v889, %v943
    %v945 = vpop.f32.mrf.mxu0
    %946 = vdwg.mxu0
    %947 = vmatpush.bf16.msra.mxu0 0
    %948 = vmatpush.bf16.msra.mxu0 0
    %949 = vmatpush.bf16.msra.mxu0 0
    %950 = vmatpush.bf16.msra.mxu0 0
    %951 = vmatpush.bf16.msra.mxu0 0
    %952 = vmatpush.bf16.msra.mxu0 0
    %953 = vmatpush.bf16.msra.mxu0 0
    %954 = vmatpush.bf16.msra.mxu0 %v363
    %955 = vmatmul.bf16.gmra.mxu0 %v906
    %v956 = vpop.f32.mrf.mxu0
    %v957 = vadd.f32 %v902, %v956
    %v958 = vpop.f32.mrf.mxu0
    %959 = vdwg.mxu0
    %v960 = vadd.f32 %v918, %v124
    %v961 = vadd.f32 %v931, %v125
    %v962 = vadd.f32 %v944, %v126
    %v963 = vadd.f32 %v957, %v127
    %v964 = vxor.u32 %v960, 2147483648
    %v965 = vxor.u32 %v961, 2147483648
    %v966 = vxor.u32 %v962, 2147483648
    %v967 = vmul.f32 %v964, 1.442695
    %v968 = vpow.pop %v967
    %v969 = vmul.f32 %v965, 1.442695
    %v970 = vpow.pop %v969
    %v971 = vmul.f32 %v966, 1.442695
    %v972 = vpow.pop %v971
    %v973 = vadd.f32 %v968, 1.0
    %v974 = vadd.f32 %v970, 1.0
    %v975 = vadd.f32 %v972, 1.0
    %v976 = vrcp.pop %v973
    %v977 = vmul.f32 %v973, %v976
    %v978 = vsub.f32 1.0, %v977
    %v979 = vmul.f32 %v976, %v978
    %v980 = vadd.f32 %v976, %v979
    %vm981 = vweird.f32 %v973
    %vm982 = vweird.f32 %v976
    %vm983 = vmor %vm981, %vm982
    %v984 = vsel %vm983, %v976, %v980
    %v985 = vand.u32 2147483647, %v973
    %vm986 = vcmp.eq.f32.partialorder %v985, 8.507059e+37
    %v987 = vand.u32 %v973, 2147483648
    %v988 = vor.u32 1.1754944e-38, %v987
    %v989 = vsel %vm986, %v988, %v984
    %v990 = vmul.f32 1.0, %v989
    %v991 = vrcp.pop %v974
    %v992 = vmul.f32 %v974, %v991
    %v993 = vsub.f32 1.0, %v992
    %v994 = vmul.f32 %v991, %v993
    %v995 = vadd.f32 %v991, %v994
    %vm996 = vweird.f32 %v974
    %vm997 = vweird.f32 %v991
    %vm998 = vmor %vm996, %vm997
    %v999 = vsel %vm998, %v991, %v995
    %v1000 = vand.u32 2147483647, %v974
    %vm1001 = vcmp.eq.f32.partialorder %v1000, 8.507059e+37
    %v1002 = vand.u32 %v974, 2147483648
    %v1003 = vor.u32 1.1754944e-38, %v1002
    %v1004 = vsel %vm1001, %v1003, %v999
    %v1005 = vmul.f32 1.0, %v1004
    %v1006 = vrcp.pop %v975
    %v1007 = vmul.f32 %v975, %v1006
    %v1008 = vsub.f32 1.0, %v1007
    %v1009 = vmul.f32 %v1006, %v1008
    %v1010 = vadd.f32 %v1006, %v1009
    %vm1011 = vweird.f32 %v975
    %vm1012 = vweird.f32 %v1006
    %vm1013 = vmor %vm1011, %vm1012
    %v1014 = vsel %vm1013, %v1006, %v1010
    %v1015 = vand.u32 2147483647, %v975
    %vm1016 = vcmp.eq.f32.partialorder %v1015, 8.507059e+37
    %v1017 = vand.u32 %v975, 2147483648
    %v1018 = vor.u32 1.1754944e-38, %v1017
    %v1019 = vsel %vm1016, %v1018, %v1014
    %v1020 = vmul.f32 1.0, %v1019
    %v1021 = vtanh.pop %v963
    %v1022 = vmul.f32 %v1005, %v845
    %v1023 = vmul.f32 %v990, %v1021
    %v1024 = vadd.f32 %v1022, %v1023
    %v1025 = vtanh.pop %v1024
    %v1026 = vmul.f32 %v1020, %v1025
    %s1027 = scalar_lea.vmem [#allocation12], 24
    %1028 = vst [vmem:[%s1027] sm:$0xff] %v1026
    %s1029 = scalar_lea.vmem [#allocation4], 16
    %v1030 = vld [vmem:[%s1029] sm:$0xf]
    %v1031 = vpack.c.bf16 %v1026, %v1026
    %1032 = vmatpush.bf16.msra.mxu0 %v260
    %1033 = vmatpush.bf16.msra.mxu0 %v256
    %1034 = vmatpush.bf16.msra.mxu0 %v252
    %1035 = vmatpush.bf16.msra.mxu0 %v248
    %1036 = vmatpush.bf16.msra.mxu0 %v244
    %1037 = vmatpush.bf16.msra.mxu0 %v240
    %1038 = vmatpush.bf16.msra.mxu0 %v236
    %1039 = vmatpush.bf16.msra.mxu0 %v232
    %1040 = vmatmul.bf16.gmra.mxu0 %v1031
    %v1041 = vpop.f32.mrf.mxu0
    %v1042 = vadd.f32 0.0, %v1041
    %v1043 = vpop.f32.mrf.mxu0
    %1044 = vdwg.mxu0
    %1045 = vmatpush.bf16.msra.mxu0 %v261
    %1046 = vmatpush.bf16.msra.mxu0 %v257
    %1047 = vmatpush.bf16.msra.mxu0 %v253
    %1048 = vmatpush.bf16.msra.mxu0 %v249
    %1049 = vmatpush.bf16.msra.mxu0 %v245
    %1050 = vmatpush.bf16.msra.mxu0 %v241
    %1051 = vmatpush.bf16.msra.mxu0 %v237
    %1052 = vmatpush.bf16.msra.mxu0 %v233
    %1053 = vmatmul.bf16.gmra.mxu0 %v1031
    %v1054 = vpop.f32.mrf.mxu0
    %v1055 = vadd.f32 0.0, %v1054
    %v1056 = vpop.f32.mrf.mxu0
    %1057 = vdwg.mxu0
    %1058 = vmatpush.bf16.msra.mxu0 %v262
    %1059 = vmatpush.bf16.msra.mxu0 %v258
    %1060 = vmatpush.bf16.msra.mxu0 %v254
    %1061 = vmatpush.bf16.msra.mxu0 %v250
    %1062 = vmatpush.bf16.msra.mxu0 %v246
    %1063 = vmatpush.bf16.msra.mxu0 %v242
    %1064 = vmatpush.bf16.msra.mxu0 %v238
    %1065 = vmatpush.bf16.msra.mxu0 %v234
    %1066 = vmatmul.bf16.gmra.mxu0 %v1031
    %v1067 = vpop.f32.mrf.mxu0
    %v1068 = vadd.f32 0.0, %v1067
    %v1069 = vpop.f32.mrf.mxu0
    %1070 = vdwg.mxu0
    %1071 = vmatpush.bf16.msra.mxu0 %v263
    %1072 = vmatpush.bf16.msra.mxu0 %v259
    %1073 = vmatpush.bf16.msra.mxu0 %v255
    %1074 = vmatpush.bf16.msra.mxu0 %v251
    %1075 = vmatpush.bf16.msra.mxu0 %v247
    %1076 = vmatpush.bf16.msra.mxu0 %v243
    %1077 = vmatpush.bf16.msra.mxu0 %v239
    %1078 = vmatpush.bf16.msra.mxu0 %v235
    %1079 = vmatmul.bf16.gmra.mxu0 %v1031
    %v1080 = vpop.f32.mrf.mxu0
    %v1081 = vadd.f32 0.0, %v1080
    %v1082 = vpop.f32.mrf.mxu0
    %1083 = vdwg.mxu0
    %v1085 = vsel %vm368, %v1030, 0
    %1087 = vmatpush.bf16.msra.mxu0 0
    %1088 = vmatpush.bf16.msra.mxu0 0
    %1089 = vmatpush.bf16.msra.mxu0 0
    %1090 = vmatpush.bf16.msra.mxu0 0
    %1091 = vmatpush.bf16.msra.mxu0 0
    %1092 = vmatpush.bf16.msra.mxu0 0
    %1093 = vmatpush.bf16.msra.mxu0 0
    %1094 = vmatpush.bf16.msra.mxu0 %v360
    %1095 = vmatmul.bf16.gmra.mxu0 %v1085
    %v1096 = vpop.f32.mrf.mxu0
    %v1097 = vadd.f32 %v1042, %v1096
    %v1098 = vpop.f32.mrf.mxu0
    %1099 = vdwg.mxu0
    %1100 = vmatpush.bf16.msra.mxu0 0
    %1101 = vmatpush.bf16.msra.mxu0 0
    %1102 = vmatpush.bf16.msra.mxu0 0
    %1103 = vmatpush.bf16.msra.mxu0 0
    %1104 = vmatpush.bf16.msra.mxu0 0
    %1105 = vmatpush.bf16.msra.mxu0 0
    %1106 = vmatpush.bf16.msra.mxu0 0
    %1107 = vmatpush.bf16.msra.mxu0 %v361
    %1108 = vmatmul.bf16.gmra.mxu0 %v1085
    %v1109 = vpop.f32.mrf.mxu0
    %v1110 = vadd.f32 %v1055, %v1109
    %v1111 = vpop.f32.mrf.mxu0
    %1112 = vdwg.mxu0
    %1113 = vmatpush.bf16.msra.mxu0 0
    %1114 = vmatpush.bf16.msra.mxu0 0
    %1115 = vmatpush.bf16.msra.mxu0 0
    %1116 = vmatpush.bf16.msra.mxu0 0
    %1117 = vmatpush.bf16.msra.mxu0 0
    %1118 = vmatpush.bf16.msra.mxu0 0
    %1119 = vmatpush.bf16.msra.mxu0 0
    %1120 = vmatpush.bf16.msra.mxu0 %v362
    %1121 = vmatmul.bf16.gmra.mxu0 %v1085
    %v1122 = vpop.f32.mrf.mxu0
    %v1123 = vadd.f32 %v1068, %v1122
    %v1124 = vpop.f32.mrf.mxu0
    %1125 = vdwg.mxu0
    %1126 = vmatpush.bf16.msra.mxu0 0
    %1127 = vmatpush.bf16.msra.mxu0 0
    %1128 = vmatpush.bf16.msra.mxu0 0
    %1129 = vmatpush.bf16.msra.mxu0 0
    %1130 = vmatpush.bf16.msra.mxu0 0
    %1131 = vmatpush.bf16.msra.mxu0 0
    %1132 = vmatpush.bf16.msra.mxu0 0
    %1133 = vmatpush.bf16.msra.mxu0 %v363
    %1134 = vmatmul.bf16.gmra.mxu0 %v1085
    %v1135 = vpop.f32.mrf.mxu0
    %v1136 = vadd.f32 %v1081, %v1135
    %v1137 = vpop.f32.mrf.mxu0
    %1138 = vdwg.mxu0
    %v1139 = vadd.f32 %v1097, %v124
    %v1140 = vadd.f32 %v1110, %v125
    %v1141 = vadd.f32 %v1123, %v126
    %v1142 = vadd.f32 %v1136, %v127
    %v1143 = vxor.u32 %v1139, 2147483648
    %v1144 = vxor.u32 %v1140, 2147483648
    %v1145 = vxor.u32 %v1141, 2147483648
    %v1146 = vmul.f32 %v1143, 1.442695
    %v1147 = vpow.pop %v1146
    %v1148 = vmul.f32 %v1144, 1.442695
    %v1149 = vpow.pop %v1148
    %v1150 = vmul.f32 %v1145, 1.442695
    %v1151 = vpow.pop %v1150
    %v1152 = vadd.f32 %v1147, 1.0
    %v1153 = vadd.f32 %v1149, 1.0
    %v1154 = vadd.f32 %v1151, 1.0
    %v1155 = vrcp.pop %v1152
    %v1156 = vmul.f32 %v1152, %v1155
    %v1157 = vsub.f32 1.0, %v1156
    %v1158 = vmul.f32 %v1155, %v1157
    %v1159 = vadd.f32 %v1155, %v1158
    %vm1160 = vweird.f32 %v1152
    %vm1161 = vweird.f32 %v1155
    %vm1162 = vmor %vm1160, %vm1161
    %v1163 = vsel %vm1162, %v1155, %v1159
    %v1164 = vand.u32 2147483647, %v1152
    %vm1165 = vcmp.eq.f32.partialorder %v1164, 8.507059e+37
    %v1166 = vand.u32 %v1152, 2147483648
    %v1167 = vor.u32 1.1754944e-38, %v1166
    %v1168 = vsel %vm1165, %v1167, %v1163
    %v1169 = vmul.f32 1.0, %v1168
    %v1170 = vrcp.pop %v1153
    %v1171 = vmul.f32 %v1153, %v1170
    %v1172 = vsub.f32 1.0, %v1171
    %v1173 = vmul.f32 %v1170, %v1172
    %v1174 = vadd.f32 %v1170, %v1173
    %vm1175 = vweird.f32 %v1153
    %vm1176 = vweird.f32 %v1170
    %vm1177 = vmor %vm1175, %vm1176
    %v1178 = vsel %vm1177, %v1170, %v1174
    %v1179 = vand.u32 2147483647, %v1153
    %vm1180 = vcmp.eq.f32.partialorder %v1179, 8.507059e+37
    %v1181 = vand.u32 %v1153, 2147483648
    %v1182 = vor.u32 1.1754944e-38, %v1181
    %v1183 = vsel %vm1180, %v1182, %v1178
    %v1184 = vmul.f32 1.0, %v1183
    %v1185 = vrcp.pop %v1154
    %v1186 = vmul.f32 %v1154, %v1185
    %v1187 = vsub.f32 1.0, %v1186
    %v1188 = vmul.f32 %v1185, %v1187
    %v1189 = vadd.f32 %v1185, %v1188
    %vm1190 = vweird.f32 %v1154
    %vm1191 = vweird.f32 %v1185
    %vm1192 = vmor %vm1190, %vm1191
    %v1193 = vsel %vm1192, %v1185, %v1189
    %v1194 = vand.u32 2147483647, %v1154
    %vm1195 = vcmp.eq.f32.partialorder %v1194, 8.507059e+37
    %v1196 = vand.u32 %v1154, 2147483648
    %v1197 = vor.u32 1.1754944e-38, %v1196
    %v1198 = vsel %vm1195, %v1197, %v1193
    %v1199 = vmul.f32 1.0, %v1198
    %v1200 = vtanh.pop %v1142
    %v1201 = vmul.f32 %v1184, %v1024
    %v1202 = vmul.f32 %v1169, %v1200
    %v1203 = vadd.f32 %v1201, %v1202
    %v1204 = vtanh.pop %v1203
    %v1205 = vmul.f32 %v1199, %v1204
    %s1206 = scalar_lea.vmem [#allocation12], 32
    %1207 = vst [vmem:[%s1206] sm:$0xff] %v1205
    %s1208 = scalar_lea.vmem [#allocation4], 20
    %v1209 = vld [vmem:[%s1208] sm:$0xf]
    %v1210 = vpack.c.bf16 %v1205, %v1205
    %1211 = vmatpush.bf16.msra.mxu0 %v260
    %1212 = vmatpush.bf16.msra.mxu0 %v256
    %1213 = vmatpush.bf16.msra.mxu0 %v252
    %1214 = vmatpush.bf16.msra.mxu0 %v248
    %1215 = vmatpush.bf16.msra.mxu0 %v244
    %1216 = vmatpush.bf16.msra.mxu0 %v240
    %1217 = vmatpush.bf16.msra.mxu0 %v236
    %1218 = vmatpush.bf16.msra.mxu0 %v232
    %1219 = vmatmul.bf16.gmra.mxu0 %v1210
    %v1220 = vpop.f32.mrf.mxu0
    %v1221 = vadd.f32 0.0, %v1220
    %v1222 = vpop.f32.mrf.mxu0
    %1223 = vdwg.mxu0
    %1224 = vmatpush.bf16.msra.mxu0 %v261
    %1225 = vmatpush.bf16.msra.mxu0 %v257
    %1226 = vmatpush.bf16.msra.mxu0 %v253
    %1227 = vmatpush.bf16.msra.mxu0 %v249
    %1228 = vmatpush.bf16.msra.mxu0 %v245
    %1229 = vmatpush.bf16.msra.mxu0 %v241
    %1230 = vmatpush.bf16.msra.mxu0 %v237
    %1231 = vmatpush.bf16.msra.mxu0 %v233
    %1232 = vmatmul.bf16.gmra.mxu0 %v1210
    %v1233 = vpop.f32.mrf.mxu0
    %v1234 = vadd.f32 0.0, %v1233
    %v1235 = vpop.f32.mrf.mxu0
    %1236 = vdwg.mxu0
    %1237 = vmatpush.bf16.msra.mxu0 %v262
    %1238 = vmatpush.bf16.msra.mxu0 %v258
    %1239 = vmatpush.bf16.msra.mxu0 %v254
    %1240 = vmatpush.bf16.msra.mxu0 %v250
    %1241 = vmatpush.bf16.msra.mxu0 %v246
    %1242 = vmatpush.bf16.msra.mxu0 %v242
    %1243 = vmatpush.bf16.msra.mxu0 %v238
    %1244 = vmatpush.bf16.msra.mxu0 %v234
    %1245 = vmatmul.bf16.gmra.mxu0 %v1210
    %v1246 = vpop.f32.mrf.mxu0
    %v1247 = vadd.f32 0.0, %v1246
    %v1248 = vpop.f32.mrf.mxu0
    %1249 = vdwg.mxu0
    %1250 = vmatpush.bf16.msra.mxu0 %v263
    %1251 = vmatpush.bf16.msra.mxu0 %v259
    %1252 = vmatpush.bf16.msra.mxu0 %v255
    %1253 = vmatpush.bf16.msra.mxu0 %v251
    %1254 = vmatpush.bf16.msra.mxu0 %v247
    %1255 = vmatpush.bf16.msra.mxu0 %v243
    %1256 = vmatpush.bf16.msra.mxu0 %v239
    %1257 = vmatpush.bf16.msra.mxu0 %v235
    %1258 = vmatmul.bf16.gmra.mxu0 %v1210
    %v1259 = vpop.f32.mrf.mxu0
    %v1260 = vadd.f32 0.0, %v1259
    %v1261 = vpop.f32.mrf.mxu0
    %1262 = vdwg.mxu0
    %v1264 = vsel %vm368, %v1209, 0
    %1266 = vmatpush.bf16.msra.mxu0 0
    %1267 = vmatpush.bf16.msra.mxu0 0
    %1268 = vmatpush.bf16.msra.mxu0 0
    %1269 = vmatpush.bf16.msra.mxu0 0
    %1270 = vmatpush.bf16.msra.mxu0 0
    %1271 = vmatpush.bf16.msra.mxu0 0
    %1272 = vmatpush.bf16.msra.mxu0 0
    %1273 = vmatpush.bf16.msra.mxu0 %v360
    %1274 = vmatmul.bf16.gmra.mxu0 %v1264
    %v1275 = vpop.f32.mrf.mxu0
    %v1276 = vadd.f32 %v1221, %v1275
    %v1277 = vpop.f32.mrf.mxu0
    %1278 = vdwg.mxu0
    %1279 = vmatpush.bf16.msra.mxu0 0
    %1280 = vmatpush.bf16.msra.mxu0 0
    %1281 = vmatpush.bf16.msra.mxu0 0
    %1282 = vmatpush.bf16.msra.mxu0 0
    %1283 = vmatpush.bf16.msra.mxu0 0
    %1284 = vmatpush.bf16.msra.mxu0 0
    %1285 = vmatpush.bf16.msra.mxu0 0
    %1286 = vmatpush.bf16.msra.mxu0 %v361
    %1287 = vmatmul.bf16.gmra.mxu0 %v1264
    %v1288 = vpop.f32.mrf.mxu0
    %v1289 = vadd.f32 %v1234, %v1288
    %v1290 = vpop.f32.mrf.mxu0
    %1291 = vdwg.mxu0
    %1292 = vmatpush.bf16.msra.mxu0 0
    %1293 = vmatpush.bf16.msra.mxu0 0
    %1294 = vmatpush.bf16.msra.mxu0 0
    %1295 = vmatpush.bf16.msra.mxu0 0
    %1296 = vmatpush.bf16.msra.mxu0 0
    %1297 = vmatpush.bf16.msra.mxu0 0
    %1298 = vmatpush.bf16.msra.mxu0 0
    %1299 = vmatpush.bf16.msra.mxu0 %v362
    %1300 = vmatmul.bf16.gmra.mxu0 %v1264
    %v1301 = vpop.f32.mrf.mxu0
    %v1302 = vadd.f32 %v1247, %v1301
    %v1303 = vpop.f32.mrf.mxu0
    %1304 = vdwg.mxu0
    %1305 = vmatpush.bf16.msra.mxu0 0
    %1306 = vmatpush.bf16.msra.mxu0 0
    %1307 = vmatpush.bf16.msra.mxu0 0
    %1308 = vmatpush.bf16.msra.mxu0 0
    %1309 = vmatpush.bf16.msra.mxu0 0
    %1310 = vmatpush.bf16.msra.mxu0 0
    %1311 = vmatpush.bf16.msra.mxu0 0
    %1312 = vmatpush.bf16.msra.mxu0 %v363
    %1313 = vmatmul.bf16.gmra.mxu0 %v1264
    %v1314 = vpop.f32.mrf.mxu0
    %v1315 = vadd.f32 %v1260, %v1314
    %v1316 = vpop.f32.mrf.mxu0
    %1317 = vdwg.mxu0
    %v1318 = vadd.f32 %v1276, %v124
    %v1319 = vadd.f32 %v1289, %v125
    %v1320 = vadd.f32 %v1302, %v126
    %v1321 = vadd.f32 %v1315, %v127
    %v1322 = vxor.u32 %v1318, 2147483648
    %v1323 = vxor.u32 %v1319, 2147483648
    %v1324 = vxor.u32 %v1320, 2147483648
    %v1325 = vmul.f32 %v1322, 1.442695
    %v1326 = vpow.pop %v1325
    %v1327 = vmul.f32 %v1323, 1.442695
    %v1328 = vpow.pop %v1327
    %v1329 = vmul.f32 %v1324, 1.442695
    %v1330 = vpow.pop %v1329
    %v1331 = vadd.f32 %v1326, 1.0
    %v1332 = vadd.f32 %v1328, 1.0
    %v1333 = vadd.f32 %v1330, 1.0
    %v1334 = vrcp.pop %v1331
    %v1335 = vmul.f32 %v1331, %v1334
    %v1336 = vsub.f32 1.0, %v1335
    %v1337 = vmul.f32 %v1334, %v1336
    %v1338 = vadd.f32 %v1334, %v1337
    %vm1339 = vweird.f32 %v1331
    %vm1340 = vweird.f32 %v1334
    %vm1341 = vmor %vm1339, %vm1340
    %v1342 = vsel %vm1341, %v1334, %v1338
    %v1343 = vand.u32 2147483647, %v1331
    %vm1344 = vcmp.eq.f32.partialorder %v1343, 8.507059e+37
    %v1345 = vand.u32 %v1331, 2147483648
    %v1346 = vor.u32 1.1754944e-38, %v1345
    %v1347 = vsel %vm1344, %v1346, %v1342
    %v1348 = vmul.f32 1.0, %v1347
    %v1349 = vrcp.pop %v1332
    %v1350 = vmul.f32 %v1332, %v1349
    %v1351 = vsub.f32 1.0, %v1350
    %v1352 = vmul.f32 %v1349, %v1351
    %v1353 = vadd.f32 %v1349, %v1352
    %vm1354 = vweird.f32 %v1332
    %vm1355 = vweird.f32 %v1349
    %vm1356 = vmor %vm1354, %vm1355
    %v1357 = vsel %vm1356, %v1349, %v1353
    %v1358 = vand.u32 2147483647, %v1332
    %vm1359 = vcmp.eq.f32.partialorder %v1358, 8.507059e+37
    %v1360 = vand.u32 %v1332, 2147483648
    %v1361 = vor.u32 1.1754944e-38, %v1360
    %v1362 = vsel %vm1359, %v1361, %v1357
    %v1363 = vmul.f32 1.0, %v1362
    %v1364 = vrcp.pop %v1333
    %v1365 = vmul.f32 %v1333, %v1364
    %v1366 = vsub.f32 1.0, %v1365
    %v1367 = vmul.f32 %v1364, %v1366
    %v1368 = vadd.f32 %v1364, %v1367
    %vm1369 = vweird.f32 %v1333
    %vm1370 = vweird.f32 %v1364
    %vm1371 = vmor %vm1369, %vm1370
    %v1372 = vsel %vm1371, %v1364, %v1368
    %v1373 = vand.u32 2147483647, %v1333
    %vm1374 = vcmp.eq.f32.partialorder %v1373, 8.507059e+37
    %v1375 = vand.u32 %v1333, 2147483648
    %v1376 = vor.u32 1.1754944e-38, %v1375
    %v1377 = vsel %vm1374, %v1376, %v1372
    %v1378 = vmul.f32 1.0, %v1377
    %v1379 = vtanh.pop %v1321
    %v1380 = vmul.f32 %v1363, %v1203
    %v1381 = vmul.f32 %v1348, %v1379
    %v1382 = vadd.f32 %v1380, %v1381
    %v1383 = vtanh.pop %v1382
    %v1384 = vmul.f32 %v1378, %v1383
    %s1385 = scalar_lea.vmem [#allocation12], 40
    %1386 = vst [vmem:[%s1385] sm:$0xff] %v1384
    %s1387 = scalar_lea.vmem [#allocation4], 24
    %v1388 = vld [vmem:[%s1387] sm:$0xf]
    %v1389 = vpack.c.bf16 %v1384, %v1384
    %1390 = vmatpush.bf16.msra.mxu0 %v260
    %1391 = vmatpush.bf16.msra.mxu0 %v256
    %1392 = vmatpush.bf16.msra.mxu0 %v252
    %1393 = vmatpush.bf16.msra.mxu0 %v248
    %1394 = vmatpush.bf16.msra.mxu0 %v244
    %1395 = vmatpush.bf16.msra.mxu0 %v240
    %1396 = vmatpush.bf16.msra.mxu0 %v236
    %1397 = vmatpush.bf16.msra.mxu0 %v232
    %1398 = vmatmul.bf16.gmra.mxu0 %v1389
    %v1399 = vpop.f32.mrf.mxu0
    %v1400 = vadd.f32 0.0, %v1399
    %v1401 = vpop.f32.mrf.mxu0
    %1402 = vdwg.mxu0
    %1403 = vmatpush.bf16.msra.mxu0 %v261
    %1404 = vmatpush.bf16.msra.mxu0 %v257
    %1405 = vmatpush.bf16.msra.mxu0 %v253
    %1406 = vmatpush.bf16.msra.mxu0 %v249
    %1407 = vmatpush.bf16.msra.mxu0 %v245
    %1408 = vmatpush.bf16.msra.mxu0 %v241
    %1409 = vmatpush.bf16.msra.mxu0 %v237
    %1410 = vmatpush.bf16.msra.mxu0 %v233
    %1411 = vmatmul.bf16.gmra.mxu0 %v1389
    %v1412 = vpop.f32.mrf.mxu0
    %v1413 = vadd.f32 0.0, %v1412
    %v1414 = vpop.f32.mrf.mxu0
    %1415 = vdwg.mxu0
    %1416 = vmatpush.bf16.msra.mxu0 %v262
    %1417 = vmatpush.bf16.msra.mxu0 %v258
    %1418 = vmatpush.bf16.msra.mxu0 %v254
    %1419 = vmatpush.bf16.msra.mxu0 %v250
    %1420 = vmatpush.bf16.msra.mxu0 %v246
    %1421 = vmatpush.bf16.msra.mxu0 %v242
    %1422 = vmatpush.bf16.msra.mxu0 %v238
    %1423 = vmatpush.bf16.msra.mxu0 %v234
    %1424 = vmatmul.bf16.gmra.mxu0 %v1389
    %v1425 = vpop.f32.mrf.mxu0
    %v1426 = vadd.f32 0.0, %v1425
    %v1427 = vpop.f32.mrf.mxu0
    %1428 = vdwg.mxu0
    %1429 = vmatpush.bf16.msra.mxu0 %v263
    %1430 = vmatpush.bf16.msra.mxu0 %v259
    %1431 = vmatpush.bf16.msra.mxu0 %v255
    %1432 = vmatpush.bf16.msra.mxu0 %v251
    %1433 = vmatpush.bf16.msra.mxu0 %v247
    %1434 = vmatpush.bf16.msra.mxu0 %v243
    %1435 = vmatpush.bf16.msra.mxu0 %v239
    %1436 = vmatpush.bf16.msra.mxu0 %v235
    %1437 = vmatmul.bf16.gmra.mxu0 %v1389
    %v1438 = vpop.f32.mrf.mxu0
    %v1439 = vadd.f32 0.0, %v1438
    %v1440 = vpop.f32.mrf.mxu0
    %1441 = vdwg.mxu0
    %v1443 = vsel %vm368, %v1388, 0
    %1445 = vmatpush.bf16.msra.mxu0 0
    %1446 = vmatpush.bf16.msra.mxu0 0
    %1447 = vmatpush.bf16.msra.mxu0 0
    %1448 = vmatpush.bf16.msra.mxu0 0
    %1449 = vmatpush.bf16.msra.mxu0 0
    %1450 = vmatpush.bf16.msra.mxu0 0
    %1451 = vmatpush.bf16.msra.mxu0 0
    %1452 = vmatpush.bf16.msra.mxu0 %v360
    %1453 = vmatmul.bf16.gmra.mxu0 %v1443
    %v1454 = vpop.f32.mrf.mxu0
    %v1455 = vadd.f32 %v1400, %v1454
    %v1456 = vpop.f32.mrf.mxu0
    %1457 = vdwg.mxu0
    %1458 = vmatpush.bf16.msra.mxu0 0
    %1459 = vmatpush.bf16.msra.mxu0 0
    %1460 = vmatpush.bf16.msra.mxu0 0
    %1461 = vmatpush.bf16.msra.mxu0 0
    %1462 = vmatpush.bf16.msra.mxu0 0
    %1463 = vmatpush.bf16.msra.mxu0 0
    %1464 = vmatpush.bf16.msra.mxu0 0
    %1465 = vmatpush.bf16.msra.mxu0 %v361
    %1466 = vmatmul.bf16.gmra.mxu0 %v1443
    %v1467 = vpop.f32.mrf.mxu0
    %v1468 = vadd.f32 %v1413, %v1467
    %v1469 = vpop.f32.mrf.mxu0
    %1470 = vdwg.mxu0
    %1471 = vmatpush.bf16.msra.mxu0 0
    %1472 = vmatpush.bf16.msra.mxu0 0
    %1473 = vmatpush.bf16.msra.mxu0 0
    %1474 = vmatpush.bf16.msra.mxu0 0
    %1475 = vmatpush.bf16.msra.mxu0 0
    %1476 = vmatpush.bf16.msra.mxu0 0
    %1477 = vmatpush.bf16.msra.mxu0 0
    %1478 = vmatpush.bf16.msra.mxu0 %v362
    %1479 = vmatmul.bf16.gmra.mxu0 %v1443
    %v1480 = vpop.f32.mrf.mxu0
    %v1481 = vadd.f32 %v1426, %v1480
    %v1482 = vpop.f32.mrf.mxu0
    %1483 = vdwg.mxu0
    %1484 = vmatpush.bf16.msra.mxu0 0
    %1485 = vmatpush.bf16.msra.mxu0 0
    %1486 = vmatpush.bf16.msra.mxu0 0
    %1487 = vmatpush.bf16.msra.mxu0 0
    %1488 = vmatpush.bf16.msra.mxu0 0
    %1489 = vmatpush.bf16.msra.mxu0 0
    %1490 = vmatpush.bf16.msra.mxu0 0
    %1491 = vmatpush.bf16.msra.mxu0 %v363
    %1492 = vmatmul.bf16.gmra.mxu0 %v1443
    %v1493 = vpop.f32.mrf.mxu0
    %v1494 = vadd.f32 %v1439, %v1493
    %v1495 = vpop.f32.mrf.mxu0
    %1496 = vdwg.mxu0
    %v1497 = vadd.f32 %v1455, %v124
    %v1498 = vadd.f32 %v1468, %v125
    %v1499 = vadd.f32 %v1481, %v126
    %v1500 = vadd.f32 %v1494, %v127
    %v1501 = vxor.u32 %v1497, 2147483648
    %v1502 = vxor.u32 %v1498, 2147483648
    %v1503 = vxor.u32 %v1499, 2147483648
    %v1504 = vmul.f32 %v1501, 1.442695
    %v1505 = vpow.pop %v1504
    %v1506 = vmul.f32 %v1502, 1.442695
    %v1507 = vpow.pop %v1506
    %v1508 = vmul.f32 %v1503, 1.442695
    %v1509 = vpow.pop %v1508
    %v1510 = vadd.f32 %v1505, 1.0
    %v1511 = vadd.f32 %v1507, 1.0
    %v1512 = vadd.f32 %v1509, 1.0
    %v1513 = vrcp.pop %v1510
    %v1514 = vmul.f32 %v1510, %v1513
    %v1515 = vsub.f32 1.0, %v1514
    %v1516 = vmul.f32 %v1513, %v1515
    %v1517 = vadd.f32 %v1513, %v1516
    %vm1518 = vweird.f32 %v1510
    %vm1519 = vweird.f32 %v1513
    %vm1520 = vmor %vm1518, %vm1519
    %v1521 = vsel %vm1520, %v1513, %v1517
    %v1522 = vand.u32 2147483647, %v1510
    %vm1523 = vcmp.eq.f32.partialorder %v1522, 8.507059e+37
    %v1524 = vand.u32 %v1510, 2147483648
    %v1525 = vor.u32 1.1754944e-38, %v1524
    %v1526 = vsel %vm1523, %v1525, %v1521
    %v1527 = vmul.f32 1.0, %v1526
    %v1528 = vrcp.pop %v1511
    %v1529 = vmul.f32 %v1511, %v1528
    %v1530 = vsub.f32 1.0, %v1529
    %v1531 = vmul.f32 %v1528, %v1530
    %v1532 = vadd.f32 %v1528, %v1531
    %vm1533 = vweird.f32 %v1511
    %vm1534 = vweird.f32 %v1528
    %vm1535 = vmor %vm1533, %vm1534
    %v1536 = vsel %vm1535, %v1528, %v1532
    %v1537 = vand.u32 2147483647, %v1511
    %vm1538 = vcmp.eq.f32.partialorder %v1537, 8.507059e+37
    %v1539 = vand.u32 %v1511, 2147483648
    %v1540 = vor.u32 1.1754944e-38, %v1539
    %v1541 = vsel %vm1538, %v1540, %v1536
    %v1542 = vmul.f32 1.0, %v1541
    %v1543 = vrcp.pop %v1512
    %v1544 = vmul.f32 %v1512, %v1543
    %v1545 = vsub.f32 1.0, %v1544
    %v1546 = vmul.f32 %v1543, %v1545
    %v1547 = vadd.f32 %v1543, %v1546
    %vm1548 = vweird.f32 %v1512
    %vm1549 = vweird.f32 %v1543
    %vm1550 = vmor %vm1548, %vm1549
    %v1551 = vsel %vm1550, %v1543, %v1547
    %v1552 = vand.u32 2147483647, %v1512
    %vm1553 = vcmp.eq.f32.partialorder %v1552, 8.507059e+37
    %v1554 = vand.u32 %v1512, 2147483648
    %v1555 = vor.u32 1.1754944e-38, %v1554
    %v1556 = vsel %vm1553, %v1555, %v1551
    %v1557 = vmul.f32 1.0, %v1556
    %v1558 = vtanh.pop %v1500
    %v1559 = vmul.f32 %v1542, %v1382
    %v1560 = vmul.f32 %v1527, %v1558
    %v1561 = vadd.f32 %v1559, %v1560
    %v1562 = vtanh.pop %v1561
    %v1563 = vmul.f32 %v1557, %v1562
    %s1564 = scalar_lea.vmem [#allocation12], 48
    %1565 = vst [vmem:[%s1564] sm:$0xff] %v1563
    %s1566 = scalar_lea.vmem [#allocation4], 28
    %v1567 = vld [vmem:[%s1566] sm:$0xf]
    %v1568 = vpack.c.bf16 %v1563, %v1563
    %1569 = vmatpush.bf16.msra.mxu0 %v260
    %1570 = vmatpush.bf16.msra.mxu0 %v256
    %1571 = vmatpush.bf16.msra.mxu0 %v252
    %1572 = vmatpush.bf16.msra.mxu0 %v248
    %1573 = vmatpush.bf16.msra.mxu0 %v244
    %1574 = vmatpush.bf16.msra.mxu0 %v240
    %1575 = vmatpush.bf16.msra.mxu0 %v236
    %1576 = vmatpush.bf16.msra.mxu0 %v232
    %1577 = vmatmul.bf16.gmra.mxu0 %v1568
    %v1578 = vpop.f32.mrf.mxu0
    %v1579 = vadd.f32 0.0, %v1578
    %v1580 = vpop.f32.mrf.mxu0
    %1581 = vdwg.mxu0
    %1582 = vmatpush.bf16.msra.mxu0 %v261
    %1583 = vmatpush.bf16.msra.mxu0 %v257
    %1584 = vmatpush.bf16.msra.mxu0 %v253
    %1585 = vmatpush.bf16.msra.mxu0 %v249
    %1586 = vmatpush.bf16.msra.mxu0 %v245
    %1587 = vmatpush.bf16.msra.mxu0 %v241
    %1588 = vmatpush.bf16.msra.mxu0 %v237
    %1589 = vmatpush.bf16.msra.mxu0 %v233
    %1590 = vmatmul.bf16.gmra.mxu0 %v1568
    %v1591 = vpop.f32.mrf.mxu0
    %v1592 = vadd.f32 0.0, %v1591
    %v1593 = vpop.f32.mrf.mxu0
    %1594 = vdwg.mxu0
    %1595 = vmatpush.bf16.msra.mxu0 %v262
    %1596 = vmatpush.bf16.msra.mxu0 %v258
    %1597 = vmatpush.bf16.msra.mxu0 %v254
    %1598 = vmatpush.bf16.msra.mxu0 %v250
    %1599 = vmatpush.bf16.msra.mxu0 %v246
    %1600 = vmatpush.bf16.msra.mxu0 %v242
    %1601 = vmatpush.bf16.msra.mxu0 %v238
    %1602 = vmatpush.bf16.msra.mxu0 %v234
    %1603 = vmatmul.bf16.gmra.mxu0 %v1568
    %v1604 = vpop.f32.mrf.mxu0
    %v1605 = vadd.f32 0.0, %v1604
    %v1606 = vpop.f32.mrf.mxu0
    %1607 = vdwg.mxu0
    %1608 = vmatpush.bf16.msra.mxu0 %v263
    %1609 = vmatpush.bf16.msra.mxu0 %v259
    %1610 = vmatpush.bf16.msra.mxu0 %v255
    %1611 = vmatpush.bf16.msra.mxu0 %v251
    %1612 = vmatpush.bf16.msra.mxu0 %v247
    %1613 = vmatpush.bf16.msra.mxu0 %v243
    %1614 = vmatpush.bf16.msra.mxu0 %v239
    %1615 = vmatpush.bf16.msra.mxu0 %v235
    %1616 = vmatmul.bf16.gmra.mxu0 %v1568
    %v1617 = vpop.f32.mrf.mxu0
    %v1618 = vadd.f32 0.0, %v1617
    %v1619 = vpop.f32.mrf.mxu0
    %1620 = vdwg.mxu0
    %v1622 = vsel %vm368, %v1567, 0
    %1624 = vmatpush.bf16.msra.mxu0 0
    %1625 = vmatpush.bf16.msra.mxu0 0
    %1626 = vmatpush.bf16.msra.mxu0 0
    %1627 = vmatpush.bf16.msra.mxu0 0
    %1628 = vmatpush.bf16.msra.mxu0 0
    %1629 = vmatpush.bf16.msra.mxu0 0
    %1630 = vmatpush.bf16.msra.mxu0 0
    %1631 = vmatpush.bf16.msra.mxu0 %v360
    %1632 = vmatmul.bf16.gmra.mxu0 %v1622
    %v1633 = vpop.f32.mrf.mxu0
    %v1634 = vadd.f32 %v1579, %v1633
    %v1635 = vpop.f32.mrf.mxu0
    %1636 = vdwg.mxu0
    %1637 = vmatpush.bf16.msra.mxu0 0
    %1638 = vmatpush.bf16.msra.mxu0 0
    %1639 = vmatpush.bf16.msra.mxu0 0
    %1640 = vmatpush.bf16.msra.mxu0 0
    %1641 = vmatpush.bf16.msra.mxu0 0
    %1642 = vmatpush.bf16.msra.mxu0 0
    %1643 = vmatpush.bf16.msra.mxu0 0
    %1644 = vmatpush.bf16.msra.mxu0 %v361
    %1645 = vmatmul.bf16.gmra.mxu0 %v1622
    %v1646 = vpop.f32.mrf.mxu0
    %v1647 = vadd.f32 %v1592, %v1646
    %v1648 = vpop.f32.mrf.mxu0
    %1649 = vdwg.mxu0
    %1650 = vmatpush.bf16.msra.mxu0 0
    %1651 = vmatpush.bf16.msra.mxu0 0
    %1652 = vmatpush.bf16.msra.mxu0 0
    %1653 = vmatpush.bf16.msra.mxu0 0
    %1654 = vmatpush.bf16.msra.mxu0 0
    %1655 = vmatpush.bf16.msra.mxu0 0
    %1656 = vmatpush.bf16.msra.mxu0 0
    %1657 = vmatpush.bf16.msra.mxu0 %v362
    %1658 = vmatmul.bf16.gmra.mxu0 %v1622
    %v1659 = vpop.f32.mrf.mxu0
    %v1660 = vadd.f32 %v1605, %v1659
    %v1661 = vpop.f32.mrf.mxu0
    %1662 = vdwg.mxu0
    %1663 = vmatpush.bf16.msra.mxu0 0
    %1664 = vmatpush.bf16.msra.mxu0 0
    %1665 = vmatpush.bf16.msra.mxu0 0
    %1666 = vmatpush.bf16.msra.mxu0 0
    %1667 = vmatpush.bf16.msra.mxu0 0
    %1668 = vmatpush.bf16.msra.mxu0 0
    %1669 = vmatpush.bf16.msra.mxu0 0
    %1670 = vmatpush.bf16.msra.mxu0 %v363
    %1671 = vmatmul.bf16.gmra.mxu0 %v1622
    %v1672 = vpop.f32.mrf.mxu0
    %v1673 = vadd.f32 %v1618, %v1672
    %v1674 = vpop.f32.mrf.mxu0
    %1675 = vdwg.mxu0
    %v1676 = vadd.f32 %v1634, %v124
    %v1677 = vadd.f32 %v1647, %v125
    %v1678 = vadd.f32 %v1660, %v126
    %v1679 = vadd.f32 %v1673, %v127
    %v1680 = vxor.u32 %v1676, 2147483648
    %v1681 = vxor.u32 %v1677, 2147483648
    %v1682 = vxor.u32 %v1678, 2147483648
    %v1683 = vmul.f32 %v1680, 1.442695
    %v1684 = vpow.pop %v1683
    %v1685 = vmul.f32 %v1681, 1.442695
    %v1686 = vpow.pop %v1685
    %v1687 = vmul.f32 %v1682, 1.442695
    %v1688 = vpow.pop %v1687
    %v1689 = vadd.f32 %v1684, 1.0
    %v1690 = vadd.f32 %v1686, 1.0
    %v1691 = vadd.f32 %v1688, 1.0
    %v1692 = vrcp.pop %v1689
    %v1693 = vmul.f32 %v1689, %v1692
    %v1694 = vsub.f32 1.0, %v1693
    %v1695 = vmul.f32 %v1692, %v1694
    %v1696 = vadd.f32 %v1692, %v1695
    %vm1697 = vweird.f32 %v1689
    %vm1698 = vweird.f32 %v1692
    %vm1699 = vmor %vm1697, %vm1698
    %v1700 = vsel %vm1699, %v1692, %v1696
    %v1701 = vand.u32 2147483647, %v1689
    %vm1702 = vcmp.eq.f32.partialorder %v1701, 8.507059e+37
    %v1703 = vand.u32 %v1689, 2147483648
    %v1704 = vor.u32 1.1754944e-38, %v1703
    %v1705 = vsel %vm1702, %v1704, %v1700
    %v1706 = vmul.f32 1.0, %v1705
    %v1707 = vrcp.pop %v1690
    %v1708 = vmul.f32 %v1690, %v1707
    %v1709 = vsub.f32 1.0, %v1708
    %v1710 = vmul.f32 %v1707, %v1709
    %v1711 = vadd.f32 %v1707, %v1710
    %vm1712 = vweird.f32 %v1690
    %vm1713 = vweird.f32 %v1707
    %vm1714 = vmor %vm1712, %vm1713
    %v1715 = vsel %vm1714, %v1707, %v1711
    %v1716 = vand.u32 2147483647, %v1690
    %vm1717 = vcmp.eq.f32.partialorder %v1716, 8.507059e+37
    %v1718 = vand.u32 %v1690, 2147483648
    %v1719 = vor.u32 1.1754944e-38, %v1718
    %v1720 = vsel %vm1717, %v1719, %v1715
    %v1721 = vmul.f32 1.0, %v1720
    %v1722 = vrcp.pop %v1691
    %v1723 = vmul.f32 %v1691, %v1722
    %v1724 = vsub.f32 1.0, %v1723
    %v1725 = vmul.f32 %v1722, %v1724
    %v1726 = vadd.f32 %v1722, %v1725
    %vm1727 = vweird.f32 %v1691
    %vm1728 = vweird.f32 %v1722
    %vm1729 = vmor %vm1727, %vm1728
    %v1730 = vsel %vm1729, %v1722, %v1726
    %v1731 = vand.u32 2147483647, %v1691
    %vm1732 = vcmp.eq.f32.partialorder %v1731, 8.507059e+37
    %v1733 = vand.u32 %v1691, 2147483648
    %v1734 = vor.u32 1.1754944e-38, %v1733
    %v1735 = vsel %vm1732, %v1734, %v1730
    %v1736 = vmul.f32 1.0, %v1735
    %v1737 = vtanh.pop %v1679
    %v1738 = vmul.f32 %v1721, %v1561
    %v1739 = vmul.f32 %v1706, %v1737
    %v1740 = vadd.f32 %v1738, %v1739
    %v1741 = vtanh.pop %v1740
    %v1742 = vmul.f32 %v1736, %v1741
    %s1743 = scalar_lea.vmem [#allocation12], 56
    %1744 = vst [vmem:[%s1743] sm:$0xff] %v1742
    %1745 = vst [vmem:[#allocation2] sm:$0xff] %v1742
    %1746 = vst [vmem:[#allocation3] sm:$0xff] %v1740
    // Predicated region
    $region38: #{tpu_custom_call.1} parent=1 // pred_check
      _
    $region39: #{tpu_custom_call.1} parent=1 // pred_check_branch
      %1748 = sbr.rel (0) target = $region41
    $region40: #{tpu_custom_call.1} parent=1 // pred_region
      %1750 = vsyncadd [#allocation6], 0
      %s1751 = sshll.u32 [#allocation12], 4
      %s1752 = int_to_ptr.vmem [resolvable:$true] %s1751
      %s1753 = sshll.u32 %s4, 4
      %s1754 = int_to_ptr.hbm [resolvable:$true] %s1753
      %1759 = dma.vmem_to_hbm [thread:$0]  %s1752, 1024, %s1754, [#allocation6], 128, 128, 8
    $region41: #{tpu_custom_call.1} parent=1 // pred_fallthru
      _
    // Predicated region
    $region42: #{tpu_custom_call.1} parent=1 // pred_check
      _
    $region43: #{tpu_custom_call.1} parent=1 // pred_check_branch
      %1761 = sbr.rel (0) target = $region45
    $region44: #{tpu_custom_call.1} parent=1 // pred_region
      %1763 = dma.done [#allocation6], 1024
    $region45: #{tpu_custom_call.1} parent=1 // pred_fallthru
      _
    %1764 = vsyncpa [#allocation5], 1
    %1765 = vsyncpa [#allocation8], 1
    %1766 = vsyncpa [#allocation11], 1
    %1767 = vsyncpa [#allocation6], 1

</llo_original>
